<compile_context>
chip_gen: v6e
topology: v6e:2x2x1
jax: 0.10.0
libtpu: 0.0.40
codegen_flags: <defaults>
</compile_context>

<pallas_src>
import jax
import jax.numpy as jnp
import numpy as np
from jax.experimental import pallas as pl
from jax.experimental.pallas import tpu as pltpu

# ---- model constants (match the PyTorch module's params.*) ----
NUM_CLASSES = 5
W_OUT = 8
MAX_SEQ_SIZE = 16
L = MAX_SEQ_SIZE * W_OUT          # 128 : fc1 input size
H1 = 320                          # fc1 hidden
H2 = 2 * H1                       # 640 : concat of the two chains
OUT1 = NUM_CLASSES * W_OUT        # 40  : fc2 output
JOIN_IN = OUT1 + H2               # 680 : binary_cls_join input
JOIN_H = 20
OUT2 = 2 * W_OUT                  # 16  : binary_cls_join output
SLAB = 128                        # lane-dense width: out | out2 | zeros (and padded h3)
FUSED_N = SLAB + H1               # 448 : fused [join-partial(128) | fc2(320)] columns
WO_ROWS = H1 + SLAB               # 448 : stacked (w2b | padded w3b) rows

MXU_DTYPE = jnp.bfloat16          # matmul-operand dtype (f32 MXU accumulation)


def _make_dft_basis(n):
    k = np.arange(n)
    ang = 2.0 * np.pi * np.outer(np.arange(n), k) / n
    cos = np.cos(ang)
    sin = -np.sin(ang)            # sign irrelevant for the magnitude
    return jnp.asarray(np.concatenate([cos, sin], axis=1), dtype=jnp.float32)


def _leaky_relu(x, slope=0.01):
    return jnp.where(x > 0, x, slope * x)


def fft2c_kernel(x_ref, cs_ref, w1_ref, wf_ref, wjo_ref, wo_ref, b_ref, out_ref):
    # x_ref: [bb, 2L] f32; channel 0 in lanes 0..127, channel 1 in lanes 128..255.
    x0 = x_ref[:, :L].astype(MXU_DTYPE)
    x1 = x_ref[:, L:].astype(MXU_DTYPE)

    # --- real DFT magnitude: one bf16 matmul per channel against the resident
    #     fused [cos|sin] basis; magnitude math stays f32.
    dft0 = jnp.dot(x0, cs_ref[...], preferred_element_type=jnp.float32)   # [bb, 2L]
    dft1 = jnp.dot(x1, cs_ref[...], preferred_element_type=jnp.float32)
    mag0 = jnp.sqrt(dft0[:, :L] * dft0[:, :L] + dft0[:, L:] * dft0[:, L:])
    mag1 = jnp.sqrt(dft1[:, :L] * dft1[:, :L] + dft1[:, L:] * dft1[:, L:])

    # --- fc1 per chain: Dropout(eval id) -> Linear(L, 320) -> LeakyReLU
    b1 = b_ref[0:1, :]                                                    # [1, 320]
    h1_0 = _leaky_relu(jnp.dot(mag0.astype(MXU_DTYPE), w1_ref[...],
                               preferred_element_type=jnp.float32) + b1)
    h1_1 = _leaky_relu(jnp.dot(mag1.astype(MXU_DTYPE), w1_ref[...],
                               preferred_element_type=jnp.float32) + b1)
    xi0 = h1_0.astype(MXU_DTYPE)                                          # chain 1
    xi1 = h1_1.astype(MXU_DTYPE)                                          # chain 2

    # --- fused fc2 + join chain-part (split-K replaces the lane concat):
    #     fused[:, :128]   = xi0 @ w3a[:320] + xi1 @ w3a[320:640]  (lane-dense, 0..19 real)
    #     fused[:, 128:]   = xi0 @ w2a[:320] + xi1 @ w2a[320:640]  (fc2 pre-activation)
    fused = (jnp.dot(xi0, wf_ref[:H1, :], preferred_element_type=jnp.float32)
             + jnp.dot(xi1, wf_ref[H1:, :], preferred_element_type=jnp.float32))
    h3_part = fused[:, :SLAB]                                             # [bb, 128]
    h2 = _leaky_relu(fused[:, SLAB:] + b_ref[1:2, :]).astype(MXU_DTYPE)   # [bb, 320]

    # Lane-dense "out" slab: cols 0..39 = fc2 output (incl. b2b), cols 40..55
    # pre-loaded with b3b (so only out2's matmul contribution is added later).
    b_out = b_ref[3:4, :SLAB]
    out_slab = jnp.dot(h2, wo_ref[:H1, :],
                       preferred_element_type=jnp.float32) + b_out        # [bb, 128]

    # --- binary_cls_join hidden: chain partial + out-slab contribution.
    # wjo rows 40..127 are zero, so the b3b/zero junk lanes of out_slab vanish;
    # wjo cols 20..127 are zero, so h3 lanes 20..127 stay exactly 0 after relu.
    b3a = b_ref[2:3, :SLAB]
    h3 = jnp.maximum(h3_part
                     + jnp.dot(out_slab.astype(MXU_DTYPE), wjo_ref[...],
                               preferred_element_type=jnp.float32)
                     + b3a, 0.0).astype(MXU_DTYPE)                        # [bb, 128]

    # out2 contribution lands in cols 40..55 via the lane-shifted, row-padded w3b.
    out2_slab = jnp.dot(h3, wo_ref[H1:, :], preferred_element_type=jnp.float32)

    out_ref[...] = out_slab + out2_slab                                   # unmasked 128-lane store


def init_params(key):
    """Deterministic synthetic weights (shapes match the nn.Module __init__),
    stored [in_features, out_features]."""
    ks = jax.random.split(key, 5)

    def lin(k, fan_in, fan_out):
        bound = 1.0 / np.sqrt(fan_in)
        kw, kb = jax.random.split(k)
        w = jax.random.uniform(kw, (fan_in, fan_out), jnp.float32, -bound, bound)
        b = jax.random.uniform(kb, (1, fan_out), jnp.float32, -bound, bound)
        return w, b

    w1, b1 = lin(ks[0], L, H1)                 # fc1 Linear
    w2a, b2a = lin(ks[1], H2, H1)              # fc2 Linear #1
    w2b, b2b = lin(ks[2], H1, OUT1)            # fc2 Linear #2
    w3a, b3a = lin(ks[3], JOIN_IN, JOIN_H)     # binary_cls_join Linear #1
    w3b, b3b = lin(ks[4], JOIN_H, OUT2)        # binary_cls_join Linear #2
    return (w1, b1, w2a, b2a, w2b, b2b, w3a, b3a, w3b, b3b)


def pack_params(params):
    """One-time repack of module-layout params into kernel-friendly operands."""
    w1, b1, w2a, b2a, w2b, b2b, w3a, b3a, w3b, b3b = params

    cs = _make_dft_basis(L).astype(MXU_DTYPE)             # [128, 256] bf16 [cos|sin]
    w1_p = w1.astype(MXU_DTYPE)                           # [128, 320]

    # Fused fc2 + join-chain weight [640, 448]:
    #   cols 0..19    : w3a rows 0..639 (join hidden, chain part); cols 20..127 zero
    #   cols 128..447 : w2a (fc2)
    wf = jnp.zeros((H2, FUSED_N), jnp.float32)
    wf = wf.at[:, :JOIN_H].set(w3a[:H2, :])
    wf = wf.at[:, SLAB:].set(w2a)
    wf_p = wf.astype(MXU_DTYPE)

    # Join weight rows for the out-slab operand [128, 128]:
    #   rows 0..39 (out lanes) x cols 0..19 (join hidden) = w3a[640:680]; rest zero.
    wjo = jnp.zeros((SLAB, SLAB), jnp.float32)
    wjo = wjo.at[:OUT1, :JOIN_H].set(w3a[H2:, :])
    wjo_p = wjo.astype(MXU_DTYPE)

    # Stacked lane-dense output weights [448, 128]:
    #   rows 0..319   : fc2 Linear #2 (w2b), cols 0..39
    #   rows 320..339 : join Linear #2 (w3b), lane-shifted to cols 40..55
    #   rows 340..447 : zeros (matching the zero-padded h3 lanes)
    wo = jnp.zeros((WO_ROWS, SLAB), jnp.float32)
    wo = wo.at[:H1, :OUT1].set(w2b)
    wo = wo.at[H1:H1 + JOIN_H, OUT1:OUT1 + OUT2].set(w3b)
    wo_p = wo.astype(MXU_DTYPE)

    # All biases in one f32 [8, 320] array (single DMA descriptor):
    #   row 0: b1, row 1: b2a, row 2: b3a (lanes 0..19),
    #   row 3: output-slab bias (b2b @ 0..39 | b3b @ 40..55).
    biases = jnp.zeros((8, H1), jnp.float32)
    biases = biases.at[0, :].set(b1.reshape(-1))
    biases = biases.at[1, :].set(b2a.reshape(-1))
    biases = biases.at[2, :JOIN_H].set(b3a.reshape(-1))
    biases = biases.at[3, :OUT1].set(b2b.reshape(-1))
    biases = biases.at[3, OUT1:OUT1 + OUT2].set(b3b.reshape(-1))

    return (cs, w1_p, wf_p, wjo_p, wo_p, biases)


@jax.jit
def fft2c_forward(x, packed):
    """x: [B, 2, L] f32 -> (out [B, W_OUT, NUM_CLASSES], out2 [B, W_OUT, 2])."""
    cs, w1_p, wf_p, wjo_p, wo_p, biases = packed
    B = x.shape[0]

    # Free view: channel 0 = lanes 0..127, channel 1 = lanes 128..255.
    x2 = x.astype(jnp.float32).reshape(B, 2 * L)

    # Batch block: multiple of 8 sublanes; >= 2 grid blocks whenever B > 8 so
    # the "parallel" batch axis can shard across both v7x TensorCores
    # (megacore), capped at 1024 rows to stay comfortably inside the v7x
    # 64 MiB VMEM while still amortizing per-step grid overhead on v5e/v6e.
    if B <= 8:
        bb = 8
    else:
        half = -(-B // 2)
        bb = min(1024, ((half + 7) // 8) * 8)
    n_blk = -(-B // bb)
    b_pad = n_blk * bb
    if b_pad != B:
        x2 = jnp.pad(x2, ((0, b_pad - B), (0, 0)))

    const = lambda i: (0, 0)
    # TODO(synk): could add pipeline_mode=pl.Buffered(1) on the constant weight
    # specs for ~1 MiB extra VMEM headroom on v7x; skipped as it is negligible here.
    slab = pl.pallas_call(
        fft2c_kernel,
        out_shape=jax.ShapeDtypeStruct((b_pad, SLAB), jnp.float32),
        grid=(n_blk,),
        in_specs=[
            pl.BlockSpec((bb, 2 * L), lambda i: (i, 0)),       # x (pipelined)
            pl.BlockSpec((L, 2 * L), const),                   # bf16 [cos|sin] basis
            pl.BlockSpec((L, H1), const),                      # w1
            pl.BlockSpec((H2, FUSED_N), const),                # fused [join-part | w2a]
            pl.BlockSpec((SLAB, SLAB), const),                 # join weight, out-slab rows
            pl.BlockSpec((WO_ROWS, SLAB), const),              # stacked w2b | padded w3b
            pl.BlockSpec((8, H1), const),                      # packed biases
        ],
        out_specs=pl.BlockSpec((bb, SLAB), lambda i: (i, 0)),
        compiler_params=pltpu.CompilerParams(
            dimension_semantics=("parallel",),
            vmem_limit_bytes=48 * 1024 * 1024,
        ),
    )(x2, cs, w1_p, wf_p, wjo_p, wo_p, biases)

    slab = slab[:B]
    out = slab[:, :OUT1].reshape(-1, W_OUT, NUM_CLASSES)
    out2 = slab[:, OUT1:OUT1 + OUT2].reshape(-1, W_OUT, 2)
    return out, out2


def fft2c_reference(x, params):
    """Pure-JAX reference mirroring the PyTorch forward (eval mode)."""
    w1, b1, w2a, b2a, w2b, b2b, w3a, b3a, w3b, b3b = params
    xis = []
    for i in range(2):
        xi = x[:, i, :]
        f = jnp.fft.fft(xi)
        mag = jnp.sqrt(f.real ** 2 + f.imag ** 2)
        xis.append(_leaky_relu(mag @ w1 + b1))
    out_cat = jnp.concatenate(xis, axis=-1)
    h2 = _leaky_relu(out_cat @ w2a + b2a)
    out = h2 @ w2b + b2b
    tmpx = jnp.concatenate([out_cat, out], axis=-1)
    h3 = jnp.maximum(tmpx @ w3a + b3a, 0.0)
    out2 = h3 @ w3b + b3b
    return out.reshape(-1, W_OUT, NUM_CLASSES), out2.reshape(-1, W_OUT, 2)


if __name__ == "__main__":
    key = jax.random.PRNGKey(0)
    kx, kp = jax.random.split(key)

    B = 2
    x = jax.random.normal(kx, (B, 2, L), dtype=jnp.float32)
    params = init_params(kp)
    packed = pack_params(params)

    out, out2 = fft2c_forward(x, packed)
    jax.block_until_ready((out, out2))

    ref_out, ref_out2 = fft2c_reference(x, params)
    assert out.shape == (B, W_OUT, NUM_CLASSES) and out2.shape == (B, W_OUT, 2)
    # Tolerance covers end-to-end bf16 MXU operands (incl. the bf16 DFT basis);
    # all accumulation and element-wise math is f32.
    np.testing.assert_allclose(np.asarray(out), np.asarray(ref_out), rtol=3e-2, atol=3e-2)
    np.testing.assert_allclose(np.asarray(out2), np.asarray(ref_out2), rtol=3e-2, atol=3e-2)

    print("KERNEL_OK")
</pallas_src>

<mosaic_0001>
module attributes {stable_mosaic.version = 11 : i64} {
  func.func @fft2c_kernel(%arg0: i32, %arg1: memref<8x256xf32, #tpu.memory_space<vmem>>, %arg2: memref<128x256xbf16, #tpu.memory_space<vmem>>, %arg3: memref<128x320xbf16, #tpu.memory_space<vmem>>, %arg4: memref<640x448xbf16, #tpu.memory_space<vmem>>, %arg5: memref<128x128xbf16, #tpu.memory_space<vmem>>, %arg6: memref<448x128xbf16, #tpu.memory_space<vmem>>, %arg7: memref<8x320xf32, #tpu.memory_space<vmem>>, %arg8: memref<8x128xf32, #tpu.memory_space<vmem>>) attributes {dimension_semantics = [#tpu.dimension_semantics<parallel>], iteration_bounds = array<i64: 1>, scalar_prefetch = 0 : i64, scratch_operands = 0 : i64, tpu.core_type = #tpu.core_type<tc>, window_params = [{transform_indices = @transform_0, window_bounds = array<i64: 8, 256>}, {pipeline_mode = #tpu.pipeline_mode<synchronous>, transform_indices = @transform_1, window_bounds = array<i64: 128, 256>}, {pipeline_mode = #tpu.pipeline_mode<synchronous>, transform_indices = @transform_2, window_bounds = array<i64: 128, 320>}, {pipeline_mode = #tpu.pipeline_mode<synchronous>, transform_indices = @transform_3, window_bounds = array<i64: 640, 448>}, {pipeline_mode = #tpu.pipeline_mode<synchronous>, transform_indices = @transform_4, window_bounds = array<i64: 128, 128>}, {pipeline_mode = #tpu.pipeline_mode<synchronous>, transform_indices = @transform_5, window_bounds = array<i64: 448, 128>}, {pipeline_mode = #tpu.pipeline_mode<synchronous>, transform_indices = @transform_6, window_bounds = array<i64: 8, 320>}, {transform_indices = @transform_7, window_bounds = array<i64: 8, 128>}]} {
    %c0 = arith.constant 0 : index
    %c0_0 = arith.constant 0 : index
    %0 = vector.load %arg1[%c0, %c0_0] : memref<8x256xf32, #tpu.memory_space<vmem>>, vector<8x128xf32>
    %1 = arith.truncf %0 : vector<8x128xf32> to vector<8x128xbf16>
    %c0_1 = arith.constant 0 : index
    %c128 = arith.constant 128 : index
    %2 = vector.load %arg1[%c0_1, %c128] : memref<8x256xf32, #tpu.memory_space<vmem>>, vector<8x128xf32>
    %3 = arith.truncf %2 : vector<8x128xf32> to vector<8x128xbf16>
    %c0_2 = arith.constant 0 : index
    %c0_3 = arith.constant 0 : index
    %4 = vector.load %arg2[%c0_2, %c0_3] : memref<128x256xbf16, #tpu.memory_space<vmem>>, vector<128x256xbf16>
    %cst = arith.constant dense<0.000000e+00> : vector<8x256xf32>
    %5 = tpu.matmul %1, %4, %cst {dimension_numbers = #tpu.dot_dimension_numbers<[1], [0], [0], [1], [0, 0, 1, 1], [], []>} : vector<8x128xbf16>, vector<128x256xbf16>, vector<8x256xf32> -> vector<8x256xf32>
    %c0_4 = arith.constant 0 : index
    %c0_5 = arith.constant 0 : index
    %6 = vector.load %arg2[%c0_4, %c0_5] : memref<128x256xbf16, #tpu.memory_space<vmem>>, vector<128x256xbf16>
    %cst_6 = arith.constant dense<0.000000e+00> : vector<8x256xf32>
    %7 = tpu.matmul %3, %6, %cst_6 {dimension_numbers = #tpu.dot_dimension_numbers<[1], [0], [0], [1], [0, 0, 1, 1], [], []>} : vector<8x128xbf16>, vector<128x256xbf16>, vector<8x256xf32> -> vector<8x256xf32>
    %8 = vector.extract_strided_slice %5 {offsets = [0, 0], sizes = [8, 128], strides = [1, 1]} : vector<8x256xf32> to vector<8x128xf32>
    %9 = vector.extract_strided_slice %5 {offsets = [0, 0], sizes = [8, 128], strides = [1, 1]} : vector<8x256xf32> to vector<8x128xf32>
    %10 = arith.mulf %8, %9 : vector<8x128xf32>
    %11 = vector.extract_strided_slice %5 {offsets = [0, 128], sizes = [8, 128], strides = [1, 1]} : vector<8x256xf32> to vector<8x128xf32>
    %12 = vector.extract_strided_slice %5 {offsets = [0, 128], sizes = [8, 128], strides = [1, 1]} : vector<8x256xf32> to vector<8x128xf32>
    %13 = arith.mulf %11, %12 : vector<8x128xf32>
    %14 = arith.addf %10, %13 : vector<8x128xf32>
    %15 = math.sqrt %14 : vector<8x128xf32>
    %16 = vector.extract_strided_slice %7 {offsets = [0, 0], sizes = [8, 128], strides = [1, 1]} : vector<8x256xf32> to vector<8x128xf32>
    %17 = vector.extract_strided_slice %7 {offsets = [0, 0], sizes = [8, 128], strides = [1, 1]} : vector<8x256xf32> to vector<8x128xf32>
    %18 = arith.mulf %16, %17 : vector<8x128xf32>
    %19 = vector.extract_strided_slice %7 {offsets = [0, 128], sizes = [8, 128], strides = [1, 1]} : vector<8x256xf32> to vector<8x128xf32>
    %20 = vector.extract_strided_slice %7 {offsets = [0, 128], sizes = [8, 128], strides = [1, 1]} : vector<8x256xf32> to vector<8x128xf32>
    %21 = arith.mulf %19, %20 : vector<8x128xf32>
    %22 = arith.addf %18, %21 : vector<8x128xf32>
    %23 = math.sqrt %22 : vector<8x128xf32>
    %c0_7 = arith.constant 0 : index
    %c0_8 = arith.constant 0 : index
    %24 = vector.load %arg7[%c0_7, %c0_8] : memref<8x320xf32, #tpu.memory_space<vmem>>, vector<1x320xf32>
    %25 = arith.truncf %15 : vector<8x128xf32> to vector<8x128xbf16>
    %c0_9 = arith.constant 0 : index
    %c0_10 = arith.constant 0 : index
    %26 = vector.load %arg3[%c0_9, %c0_10] : memref<128x320xbf16, #tpu.memory_space<vmem>>, vector<128x320xbf16>
    %cst_11 = arith.constant dense<0.000000e+00> : vector<8x320xf32>
    %27 = tpu.matmul %25, %26, %cst_11 {dimension_numbers = #tpu.dot_dimension_numbers<[1], [0], [0], [1], [0, 0, 1, 1], [], []>} : vector<8x128xbf16>, vector<128x320xbf16>, vector<8x320xf32> -> vector<8x320xf32>
    %28 = vector.broadcast %24 : vector<1x320xf32> to vector<8x320xf32>
    %29 = arith.addf %27, %28 : vector<8x320xf32>
    %cst_12 = arith.constant 0.000000e+00 : f32
    %30 = vector.broadcast %cst_12 : f32 to vector<8x320xf32>
    %31 = arith.cmpf ogt, %29, %30 : vector<8x320xf32>
    %cst_13 = arith.constant 0.00999999977 : f32
    %32 = vector.broadcast %cst_13 : f32 to vector<8x320xf32>
    %33 = arith.mulf %32, %29 : vector<8x320xf32>
    %34 = arith.select %31, %29, %33 : vector<8x320xi1>, vector<8x320xf32>
    %35 = arith.truncf %23 : vector<8x128xf32> to vector<8x128xbf16>
    %c0_14 = arith.constant 0 : index
    %c0_15 = arith.constant 0 : index
    %36 = vector.load %arg3[%c0_14, %c0_15] : memref<128x320xbf16, #tpu.memory_space<vmem>>, vector<128x320xbf16>
    %cst_16 = arith.constant dense<0.000000e+00> : vector<8x320xf32>
    %37 = tpu.matmul %35, %36, %cst_16 {dimension_numbers = #tpu.dot_dimension_numbers<[1], [0], [0], [1], [0, 0, 1, 1], [], []>} : vector<8x128xbf16>, vector<128x320xbf16>, vector<8x320xf32> -> vector<8x320xf32>
    %38 = vector.broadcast %24 : vector<1x320xf32> to vector<8x320xf32>
    %39 = arith.addf %37, %38 : vector<8x320xf32>
    %cst_17 = arith.constant 0.000000e+00 : f32
    %40 = vector.broadcast %cst_17 : f32 to vector<8x320xf32>
    %41 = arith.cmpf ogt, %39, %40 : vector<8x320xf32>
    %cst_18 = arith.constant 0.00999999977 : f32
    %42 = vector.broadcast %cst_18 : f32 to vector<8x320xf32>
    %43 = arith.mulf %42, %39 : vector<8x320xf32>
    %44 = arith.select %41, %39, %43 : vector<8x320xi1>, vector<8x320xf32>
    %45 = arith.truncf %34 : vector<8x320xf32> to vector<8x320xbf16>
    %46 = arith.truncf %44 : vector<8x320xf32> to vector<8x320xbf16>
    %c0_19 = arith.constant 0 : index
    %c0_20 = arith.constant 0 : index
    %47 = vector.load %arg4[%c0_19, %c0_20] : memref<640x448xbf16, #tpu.memory_space<vmem>>, vector<320x448xbf16>
    %cst_21 = arith.constant dense<0.000000e+00> : vector<8x448xf32>
    %48 = tpu.matmul %45, %47, %cst_21 {dimension_numbers = #tpu.dot_dimension_numbers<[1], [0], [0], [1], [0, 0, 1, 1], [], []>} : vector<8x320xbf16>, vector<320x448xbf16>, vector<8x448xf32> -> vector<8x448xf32>
    %c320 = arith.constant 320 : index
    %c0_22 = arith.constant 0 : index
    %49 = vector.load %arg4[%c320, %c0_22] : memref<640x448xbf16, #tpu.memory_space<vmem>>, vector<320x448xbf16>
    %cst_23 = arith.constant dense<0.000000e+00> : vector<8x448xf32>
    %50 = tpu.matmul %46, %49, %cst_23 {dimension_numbers = #tpu.dot_dimension_numbers<[1], [0], [0], [1], [0, 0, 1, 1], [], []>} : vector<8x320xbf16>, vector<320x448xbf16>, vector<8x448xf32> -> vector<8x448xf32>
    %51 = arith.addf %48, %50 : vector<8x448xf32>
    %52 = vector.extract_strided_slice %51 {offsets = [0, 0], sizes = [8, 128], strides = [1, 1]} : vector<8x448xf32> to vector<8x128xf32>
    %53 = vector.extract_strided_slice %51 {offsets = [0, 128], sizes = [8, 320], strides = [1, 1]} : vector<8x448xf32> to vector<8x320xf32>
    %c1 = arith.constant 1 : index
    %c0_24 = arith.constant 0 : index
    %54 = vector.load %arg7[%c1, %c0_24] : memref<8x320xf32, #tpu.memory_space<vmem>>, vector<1x320xf32>
    %55 = vector.broadcast %54 : vector<1x320xf32> to vector<8x320xf32>
    %56 = arith.addf %53, %55 : vector<8x320xf32>
    %cst_25 = arith.constant 0.000000e+00 : f32
    %57 = vector.broadcast %cst_25 : f32 to vector<8x320xf32>
    %58 = arith.cmpf ogt, %56, %57 : vector<8x320xf32>
    %cst_26 = arith.constant 0.00999999977 : f32
    %59 = vector.broadcast %cst_26 : f32 to vector<8x320xf32>
    %60 = arith.mulf %59, %56 : vector<8x320xf32>
    %61 = arith.select %58, %56, %60 : vector<8x320xi1>, vector<8x320xf32>
    %62 = arith.truncf %61 : vector<8x320xf32> to vector<8x320xbf16>
    %c3 = arith.constant 3 : index
    %c0_27 = arith.constant 0 : index
    %63 = vector.load %arg7[%c3, %c0_27] : memref<8x320xf32, #tpu.memory_space<vmem>>, vector<1x128xf32>
    %c0_28 = arith.constant 0 : index
    %c0_29 = arith.constant 0 : index
    %64 = vector.load %arg6[%c0_28, %c0_29] : memref<448x128xbf16, #tpu.memory_space<vmem>>, vector<320x128xbf16>
    %cst_30 = arith.constant dense<0.000000e+00> : vector<8x128xf32>
    %65 = tpu.matmul %62, %64, %cst_30 {dimension_numbers = #tpu.dot_dimension_numbers<[1], [0], [0], [1], [0, 0, 1, 1], [], []>} : vector<8x320xbf16>, vector<320x128xbf16>, vector<8x128xf32> -> vector<8x128xf32>
    %66 = vector.broadcast %63 : vector<1x128xf32> to vector<8x128xf32>
    %67 = arith.addf %65, %66 : vector<8x128xf32>
    %c2 = arith.constant 2 : index
    %c0_31 = arith.constant 0 : index
    %68 = vector.load %arg7[%c2, %c0_31] : memref<8x320xf32, #tpu.memory_space<vmem>>, vector<1x128xf32>
    %69 = arith.truncf %67 : vector<8x128xf32> to vector<8x128xbf16>
    %c0_32 = arith.constant 0 : index
    %c0_33 = arith.constant 0 : index
    %70 = vector.load %arg5[%c0_32, %c0_33] : memref<128x128xbf16, #tpu.memory_space<vmem>>, vector<128x128xbf16>
    %cst_34 = arith.constant dense<0.000000e+00> : vector<8x128xf32>
    %71 = tpu.matmul %69, %70, %cst_34 {dimension_numbers = #tpu.dot_dimension_numbers<[1], [0], [0], [1], [0, 0, 1, 1], [], []>} : vector<8x128xbf16>, vector<128x128xbf16>, vector<8x128xf32> -> vector<8x128xf32>
    %72 = arith.addf %52, %71 : vector<8x128xf32>
    %73 = vector.broadcast %68 : vector<1x128xf32> to vector<8x128xf32>
    %74 = arith.addf %72, %73 : vector<8x128xf32>
    %cst_35 = arith.constant 0.000000e+00 : f32
    %75 = vector.broadcast %cst_35 : f32 to vector<8x128xf32>
    %76 = arith.maximumf %74, %75 : vector<8x128xf32>
    %77 = arith.truncf %76 : vector<8x128xf32> to vector<8x128xbf16>
    %c320_36 = arith.constant 320 : index
    %c0_37 = arith.constant 0 : index
    %78 = vector.load %arg6[%c320_36, %c0_37] : memref<448x128xbf16, #tpu.memory_space<vmem>>, vector<128x128xbf16>
    %cst_38 = arith.constant dense<0.000000e+00> : vector<8x128xf32>
    %79 = tpu.matmul %77, %78, %cst_38 {dimension_numbers = #tpu.dot_dimension_numbers<[1], [0], [0], [1], [0, 0, 1, 1], [], []>} : vector<8x128xbf16>, vector<128x128xbf16>, vector<8x128xf32> -> vector<8x128xf32>
    %80 = arith.addf %67, %79 : vector<8x128xf32>
    %c0_39 = arith.constant 0 : index
    %c0_40 = arith.constant 0 : index
    %81 = vector.load %arg8[%c0_39, %c0_40] : memref<8x128xf32, #tpu.memory_space<vmem>>, vector<8x128xf32>
    tpu.vector_store %arg8[%c0_39, %c0_40], %80 {strides = array<i32>} : memref<8x128xf32, #tpu.memory_space<vmem>>, vector<8x128xf32>,
    return
  }
  func.func @transform_0(%arg0: i32) -> (i32, i32) {
    %c0_i32 = arith.constant 0 : i32
    %c0_i32_0 = arith.constant 0 : i32
    return %arg0, %c0_i32 : i32, i32
  }
  func.func @transform_1(%arg0: i32) -> (i32, i32) {
    %c0_i32 = arith.constant 0 : i32
    %c0_i32_0 = arith.constant 0 : i32
    %c0_i32_1 = arith.constant 0 : i32
    return %c0_i32, %c0_i32_0 : i32, i32
  }
  func.func @transform_2(%arg0: i32) -> (i32, i32) {
    %c0_i32 = arith.constant 0 : i32
    %c0_i32_0 = arith.constant 0 : i32
    %c0_i32_1 = arith.constant 0 : i32
    return %c0_i32, %c0_i32_0 : i32, i32
  }
  func.func @transform_3(%arg0: i32) -> (i32, i32) {
    %c0_i32 = arith.constant 0 : i32
    %c0_i32_0 = arith.constant 0 : i32
    %c0_i32_1 = arith.constant 0 : i32
    return %c0_i32, %c0_i32_0 : i32, i32
  }
  func.func @transform_4(%arg0: i32) -> (i32, i32) {
    %c0_i32 = arith.constant 0 : i32
    %c0_i32_0 = arith.constant 0 : i32
    %c0_i32_1 = arith.constant 0 : i32
    return %c0_i32, %c0_i32_0 : i32, i32
  }
  func.func @transform_5(%arg0: i32) -> (i32, i32) {
    %c0_i32 = arith.constant 0 : i32
    %c0_i32_0 = arith.constant 0 : i32
    %c0_i32_1 = arith.constant 0 : i32
    return %c0_i32, %c0_i32_0 : i32, i32
  }
  func.func @transform_6(%arg0: i32) -> (i32, i32) {
    %c0_i32 = arith.constant 0 : i32
    %c0_i32_0 = arith.constant 0 : i32
    %c0_i32_1 = arith.constant 0 : i32
    return %c0_i32, %c0_i32_0 : i32, i32
  }
  func.func @transform_7(%arg0: i32) -> (i32, i32) {
    %c0_i32 = arith.constant 0 : i32
    %c0_i32_0 = arith.constant 0 : i32
    return %arg0, %c0_i32 : i32, i32
  }
}

</mosaic_0001>

<llo_original>
// kernel: fft2c_forward.1
$region0: #{fft2c_forward.1}
  #allocation0 [shape = 'u32[]', space=smem, size = 0x4, offset = 0x4, fixed_abs, tag = 'smem constant byte address 0x4 - core index']
  #allocation1 [shape = 'u32[144,128]{1,0:T(1,128)}', space=vmem, size = 0x12000, scoped, tag = 'internal scratch']
  %s0 = inlined_call_operand.vmem [shape: f32[8,256], index: 0, kind: input, shape index: {}]
  %s1 = inlined_call_operand.vmem [shape: bf16[128,256], index: 1, kind: input, shape index: {}]
  %s2 = inlined_call_operand.vmem [shape: bf16[128,320], index: 2, kind: input, shape index: {}]
  %s3 = inlined_call_operand.vmem [shape: bf16[640,448], index: 3, kind: input, shape index: {}]
  %s4 = inlined_call_operand.vmem [shape: bf16[128,128], index: 4, kind: input, shape index: {}]
  %s5 = inlined_call_operand.vmem [shape: bf16[448,128], index: 5, kind: input, shape index: {}]
  %s6 = inlined_call_operand.vmem [shape: f32[8,320], index: 6, kind: input, shape index: {}]
  %s7 = inlined_call_operand.vmem [shape: f32[8,128], index: 7, kind: output, shape index: {}]
  %s8 = sld [smem:[#allocation0]]
  $region38: #{fft2c_forward.1} parent=0
    _
  %s10 = ssub.s32 1, %s8
  %s11 = scalar_select 0, %s10, %s8
  // Predicated region
  $region2: #{fft2c_forward.1} parent=0 // pred_check
    _
  $region3: #{fft2c_forward.1} parent=0 // pred_check_branch
    %13 = sbr.rel (0) target = $region5
  $region4: #{fft2c_forward.1} parent=0 // pred_region
    _
  $region5: #{fft2c_forward.1} parent=0 // pred_fallthru
    _
  // Predicated region
  $region6: #{fft2c_forward.1} parent=0 // pred_check
    _
  $region7: #{fft2c_forward.1} parent=0 // pred_check_branch
    %15 = sbr.rel (0) target = $region9
  $region8: #{fft2c_forward.1} parent=0 // pred_region
    _
  $region9: #{fft2c_forward.1} parent=0 // pred_fallthru
    _
  // Predicated region
  $region10: #{fft2c_forward.1} parent=0 // pred_check
    _
  $region11: #{fft2c_forward.1} parent=0 // pred_check_branch
    %17 = sbr.rel (0) target = $region13
  $region12: #{fft2c_forward.1} parent=0 // pred_region
    _
  $region13: #{fft2c_forward.1} parent=0 // pred_fallthru
    _
  // Predicated region
  $region14: #{fft2c_forward.1} parent=0 // pred_check
    _
  $region15: #{fft2c_forward.1} parent=0 // pred_check_branch
    %19 = sbr.rel (0) target = $region17
  $region16: #{fft2c_forward.1} parent=0 // pred_region
    _
  $region17: #{fft2c_forward.1} parent=0 // pred_fallthru
    _
  // Predicated region
  $region18: #{fft2c_forward.1} parent=0 // pred_check
    _
  $region19: #{fft2c_forward.1} parent=0 // pred_check_branch
    %21 = sbr.rel (0) target = $region21
  $region20: #{fft2c_forward.1} parent=0 // pred_region
    _
  $region21: #{fft2c_forward.1} parent=0 // pred_fallthru
    _
  // Predicated region
  $region22: #{fft2c_forward.1} parent=0 // pred_check
    _
  $region23: #{fft2c_forward.1} parent=0 // pred_check_branch
    %23 = sbr.rel (0) target = $region25
  $region24: #{fft2c_forward.1} parent=0 // pred_region
    _
  $region25: #{fft2c_forward.1} parent=0 // pred_fallthru
    _
  // Predicated region
  $region26: #{fft2c_forward.1} parent=0 // pred_check
    _
  $region27: #{fft2c_forward.1} parent=0 // pred_check_branch
    %25 = sbr.rel (0) target = $region29
  $region28: #{fft2c_forward.1} parent=0 // pred_region
    _
  $region29: #{fft2c_forward.1} parent=0 // pred_fallthru
    _
  %v27 = vld [vmem:[%s0] sm:$0xff]
  %v28 = vpack.c.bf16 %v27, %v27
  %v29 = vld [vmem:[%s0 + $0x8] sm:$0xff]
  %v30 = vpack.c.bf16 %v29, %v29
  %v31 = vld [vmem:[%s1] sm:$0xff]
  %v32 = vld [vmem:[%s1 + $0x8] sm:$0xff]
  %v33 = vld [vmem:[%s1 + $0x10] sm:$0xff]
  %v34 = vld [vmem:[%s1 + $0x18] sm:$0xff]
  %v35 = vld [vmem:[%s1 + $0x20] sm:$0xff]
  %v36 = vld [vmem:[%s1 + $0x28] sm:$0xff]
  %v37 = vld [vmem:[%s1 + $0x30] sm:$0xff]
  %v38 = vld [vmem:[%s1 + $0x38] sm:$0xff]
  %v39 = vld [vmem:[%s1 + $0x40] sm:$0xff]
  %v40 = vld [vmem:[%s1 + $0x48] sm:$0xff]
  %v41 = vld [vmem:[%s1 + $0x50] sm:$0xff]
  %v42 = vld [vmem:[%s1 + $0x58] sm:$0xff]
  %v43 = vld [vmem:[%s1 + $0x60] sm:$0xff]
  %v44 = vld [vmem:[%s1 + $0x68] sm:$0xff]
  %v45 = vld [vmem:[%s1 + $0x70] sm:$0xff]
  %v46 = vld [vmem:[%s1 + $0x78] sm:$0xff]
  %v63 = vunpack.c.l.b16 %v31
  %v64 = vunpack.c.h.b16 %v31
  %v65 = vunpack.c.l.b16 %v32
  %v66 = vunpack.c.h.b16 %v32
  %v67 = vunpack.c.l.b16 %v33
  %v68 = vunpack.c.h.b16 %v33
  %v69 = vunpack.c.l.b16 %v34
  %v70 = vunpack.c.h.b16 %v34
  %v71 = vunpack.c.l.b16 %v35
  %v72 = vunpack.c.h.b16 %v35
  %v73 = vunpack.c.l.b16 %v36
  %v74 = vunpack.c.h.b16 %v36
  %v75 = vunpack.c.l.b16 %v37
  %v76 = vunpack.c.h.b16 %v37
  %v77 = vunpack.c.l.b16 %v38
  %v78 = vunpack.c.h.b16 %v38
  %v79 = vunpack.c.l.b16 %v39
  %v80 = vunpack.c.h.b16 %v39
  %v81 = vunpack.c.l.b16 %v40
  %v82 = vunpack.c.h.b16 %v40
  %v83 = vunpack.c.l.b16 %v41
  %v84 = vunpack.c.h.b16 %v41
  %v85 = vunpack.c.l.b16 %v42
  %v86 = vunpack.c.h.b16 %v42
  %v87 = vunpack.c.l.b16 %v43
  %v88 = vunpack.c.h.b16 %v43
  %v89 = vunpack.c.l.b16 %v44
  %v90 = vunpack.c.h.b16 %v44
  %v91 = vunpack.c.l.b16 %v45
  %v92 = vunpack.c.h.b16 %v45
  %v93 = vunpack.c.l.b16 %v46
  %v94 = vunpack.c.h.b16 %v46
  %v95 = vpack.c.b16 %v65, %v63
  %v96 = vpack.c.b16 %v66, %v64
  %v97 = vpack.c.b16 %v69, %v67
  %v98 = vpack.c.b16 %v70, %v68
  %v99 = vpack.c.b16 %v73, %v71
  %v100 = vpack.c.b16 %v74, %v72
  %v101 = vpack.c.b16 %v77, %v75
  %v102 = vpack.c.b16 %v78, %v76
  %v103 = vpack.c.b16 %v81, %v79
  %v104 = vpack.c.b16 %v82, %v80
  %v105 = vpack.c.b16 %v85, %v83
  %v106 = vpack.c.b16 %v86, %v84
  %v107 = vpack.c.b16 %v89, %v87
  %v108 = vpack.c.b16 %v90, %v88
  %v109 = vpack.c.b16 %v93, %v91
  %v110 = vpack.c.b16 %v94, %v92
  %127 = vmatprep.subr.bf16.mxu0 %v110
  %128 = vmatpush1.bf16.msra.mxu0 %v109
  %129 = vmatprep.subr.bf16.mxu0 %v108
  %130 = vmatpush1.bf16.msra.mxu0 %v107
  %131 = vmatprep.subr.bf16.mxu0 %v106
  %132 = vmatpush1.bf16.msra.mxu0 %v105
  %133 = vmatprep.subr.bf16.mxu0 %v104
  %134 = vmatpush1.bf16.msra.mxu0 %v103
  %135 = vmatprep.subr.bf16.mxu0 %v102
  %136 = vmatpush1.bf16.msra.mxu0 %v101
  %137 = vmatprep.subr.bf16.mxu0 %v100
  %138 = vmatpush1.bf16.msra.mxu0 %v99
  %139 = vmatprep.subr.bf16.mxu0 %v98
  %140 = vmatpush1.bf16.msra.mxu0 %v97
  %141 = vmatprep.subr.bf16.mxu0 %v96
  %142 = vmatpush1.bf16.msra.mxu0 %v95
  %143 = vmatprep.subr.bf16.mxu0 0
  %144 = vmatpush2.bf16.msra.mxu0 0
  %145 = vmatprep.subr.bf16.mxu0 0
  %146 = vmatpush2.bf16.msra.mxu0 0
  %147 = vmatprep.subr.bf16.mxu0 0
  %148 = vmatpush2.bf16.msra.mxu0 0
  %149 = vmatprep.subr.bf16.mxu0 0
  %150 = vmatpush2.bf16.msra.mxu0 0
  %151 = vmatprep.subr.bf16.mxu0 0
  %152 = vmatpush2.bf16.msra.mxu0 0
  %153 = vmatprep.subr.bf16.mxu0 0
  %154 = vmatpush2.bf16.msra.mxu0 0
  %155 = vmatprep.subr.bf16.mxu0 0
  %156 = vmatpush2.bf16.msra.mxu0 0
  %157 = vmatprep.subr.bf16.mxu0 0
  %158 = vmatpush2.bf16.msra.mxu0 0
  %159 = vmatprep.mubr.bf16.mxu0 0
  %160 = vmatmul.mubr.bf16.gmra.mxu0 %v28
  %v161 = vpop.f32.mrf.mxu0
  %v162 = vadd.f32 0.0, %v161
  %v163 = vpop.f32.mrf.mxu0
  %v164 = vadd.f32 0.0, %v163
  %v165 = vpop.f32.mrf.mxu0
  %v166 = vpop.f32.mrf.mxu0
  %167 = vdwg.mxu0
  %168 = vmatprep.subr.bf16.mxu0 %v110
  %169 = vmatpush1.bf16.msra.mxu0 %v109
  %170 = vmatprep.subr.bf16.mxu0 %v108
  %171 = vmatpush1.bf16.msra.mxu0 %v107
  %172 = vmatprep.subr.bf16.mxu0 %v106
  %173 = vmatpush1.bf16.msra.mxu0 %v105
  %174 = vmatprep.subr.bf16.mxu0 %v104
  %175 = vmatpush1.bf16.msra.mxu0 %v103
  %176 = vmatprep.subr.bf16.mxu0 %v102
  %177 = vmatpush1.bf16.msra.mxu0 %v101
  %178 = vmatprep.subr.bf16.mxu0 %v100
  %179 = vmatpush1.bf16.msra.mxu0 %v99
  %180 = vmatprep.subr.bf16.mxu0 %v98
  %181 = vmatpush1.bf16.msra.mxu0 %v97
  %182 = vmatprep.subr.bf16.mxu0 %v96
  %183 = vmatpush1.bf16.msra.mxu0 %v95
  %184 = vmatprep.subr.bf16.mxu0 0
  %185 = vmatpush2.bf16.msra.mxu0 0
  %186 = vmatprep.subr.bf16.mxu0 0
  %187 = vmatpush2.bf16.msra.mxu0 0
  %188 = vmatprep.subr.bf16.mxu0 0
  %189 = vmatpush2.bf16.msra.mxu0 0
  %190 = vmatprep.subr.bf16.mxu0 0
  %191 = vmatpush2.bf16.msra.mxu0 0
  %192 = vmatprep.subr.bf16.mxu0 0
  %193 = vmatpush2.bf16.msra.mxu0 0
  %194 = vmatprep.subr.bf16.mxu0 0
  %195 = vmatpush2.bf16.msra.mxu0 0
  %196 = vmatprep.subr.bf16.mxu0 0
  %197 = vmatpush2.bf16.msra.mxu0 0
  %198 = vmatprep.subr.bf16.mxu0 0
  %199 = vmatpush2.bf16.msra.mxu0 0
  %200 = vmatprep.mubr.bf16.mxu0 0
  %201 = vmatmul.mubr.bf16.gmra.mxu0 %v30
  %v202 = vpop.f32.mrf.mxu0
  %v203 = vadd.f32 0.0, %v202
  %v204 = vpop.f32.mrf.mxu0
  %v205 = vadd.f32 0.0, %v204
  %v206 = vpop.f32.mrf.mxu0
  %v207 = vpop.f32.mrf.mxu0
  %208 = vdwg.mxu0
  %v209 = vmul.f32 %v162, %v162
  %v210 = vmul.f32 %v164, %v164
  %v211 = vadd.f32 %v209, %v210
  %v212 = vrsqrt.pop %v211
  %v213 = vmul.f32 %v211, %v212
  %vm214 = vcmp.eq.f32.partialorder %v211, inf
  %v215 = vsel %vm214, %v211, %v213
  %vm216 = vcmp.eq.f32.partialorder %v211, 0.0
  %v217 = vand.u32 %v211, 2147483648
  %v218 = vsel %vm216, %v217, %v215
  %v219 = vmul.f32 %v203, %v203
  %v220 = vmul.f32 %v205, %v205
  %v221 = vadd.f32 %v219, %v220
  %v222 = vrsqrt.pop %v221
  %v223 = vmul.f32 %v221, %v222
  %vm224 = vcmp.eq.f32.partialorder %v221, inf
  %v225 = vsel %vm224, %v221, %v223
  %vm226 = vcmp.eq.f32.partialorder %v221, 0.0
  %v227 = vand.u32 %v221, 2147483648
  %v228 = vsel %vm226, %v227, %v225
  %v229 = vld [vmem:[%s6] ss:$8 sm:$0x7]
  %v230 = vpack.c.bf16 %v218, %v218
  %v231 = vld [vmem:[%s2] sm:$0xff]
  %v232 = vld [vmem:[%s2 + $0x8] sm:$0xf]
  %v233 = vld [vmem:[%s2 + $0xc] sm:$0xff]
  %v234 = vld [vmem:[%s2 + $0x14] sm:$0xf]
  %v235 = vld [vmem:[%s2 + $0x18] sm:$0xff]
  %v236 = vld [vmem:[%s2 + $0x20] sm:$0xf]
  %v237 = vld [vmem:[%s2 + $0x24] sm:$0xff]
  %v238 = vld [vmem:[%s2 + $0x2c] sm:$0xf]
  %v239 = vld [vmem:[%s2 + $0x30] sm:$0xff]
  %v240 = vld [vmem:[%s2 + $0x38] sm:$0xf]
  %v241 = vld [vmem:[%s2 + $0x3c] sm:$0xff]
  %v242 = vld [vmem:[%s2 + $0x44] sm:$0xf]
  %v243 = vld [vmem:[%s2 + $0x48] sm:$0xff]
  %v244 = vld [vmem:[%s2 + $0x50] sm:$0xf]
  %v245 = vld [vmem:[%s2 + $0x54] sm:$0xff]
  %v246 = vld [vmem:[%s2 + $0x5c] sm:$0xf]
  %v247 = vld [vmem:[%s2 + $0x60] sm:$0xff]
  %v248 = vld [vmem:[%s2 + $0x68] sm:$0xf]
  %v249 = vld [vmem:[%s2 + $0x6c] sm:$0xff]
  %v250 = vld [vmem:[%s2 + $0x74] sm:$0xf]
  %v251 = vld [vmem:[%s2 + $0x78] sm:$0xff]
  %v252 = vld [vmem:[%s2 + $0x80] sm:$0xf]
  %v253 = vld [vmem:[%s2 + $0x84] sm:$0xff]
  %v254 = vld [vmem:[%s2 + $0x8c] sm:$0xf]
  %v255 = vld [vmem:[%s2 + $0x90] sm:$0xff]
  %v256 = vld [vmem:[%s2 + $0x98] sm:$0xf]
  %v257 = vld [vmem:[%s2 + $0x9c] sm:$0xff]
  %v258 = vld [vmem:[%s2 + $0xa4] sm:$0xf]
  %v259 = vld [vmem:[%s2 + $0xa8] sm:$0xff]
  %v260 = vld [vmem:[%s2 + $0xb0] sm:$0xf]
  %v261 = vld [vmem:[%s2 + $0xb4] sm:$0xff]
  %v262 = vld [vmem:[%s2 + $0xbc] sm:$0xf]
  %v264 = vlaneseq
  %v265 = vshrl.u32 %v264, 7
  %v266 = vsub.s32 0, %v265
  %v267 = vrot.slane %v229, %v266
  %v268 = vlaneseq
  %v269 = vshrl.u32 %v268, 7
  %v270 = vsub.s32 1, %v269
  %v271 = vrot.slane %v229, %v270
  %v272 = vlaneseq
  %v273 = vshrl.u32 %v272, 7
  %v274 = vsub.s32 2, %v273
  %v275 = vrot.slane %v229, %v274
  %v311 = vunpack.c.l.b16 %v231
  %v312 = vunpack.c.h.b16 %v231
  %v313 = vunpack.c.l.b16 %v232
  %v314 = vunpack.c.l.b16 %v233
  %v315 = vunpack.c.h.b16 %v233
  %v316 = vunpack.c.l.b16 %v234
  %v317 = vunpack.c.l.b16 %v235
  %v318 = vunpack.c.h.b16 %v235
  %v319 = vunpack.c.l.b16 %v236
  %v320 = vunpack.c.l.b16 %v237
  %v321 = vunpack.c.h.b16 %v237
  %v322 = vunpack.c.l.b16 %v238
  %v323 = vunpack.c.l.b16 %v239
  %v324 = vunpack.c.h.b16 %v239
  %v325 = vunpack.c.l.b16 %v240
  %v326 = vunpack.c.l.b16 %v241
  %v327 = vunpack.c.h.b16 %v241
  %v328 = vunpack.c.l.b16 %v242
  %v329 = vunpack.c.l.b16 %v243
  %v330 = vunpack.c.h.b16 %v243
  %v331 = vunpack.c.l.b16 %v244
  %v332 = vunpack.c.l.b16 %v245
  %v333 = vunpack.c.h.b16 %v245
  %v334 = vunpack.c.l.b16 %v246
  %v335 = vunpack.c.l.b16 %v247
  %v336 = vunpack.c.h.b16 %v247
  %v337 = vunpack.c.l.b16 %v248
  %v338 = vunpack.c.l.b16 %v249
  %v339 = vunpack.c.h.b16 %v249
  %v340 = vunpack.c.l.b16 %v250
  %v341 = vunpack.c.l.b16 %v251
  %v342 = vunpack.c.h.b16 %v251
  %v343 = vunpack.c.l.b16 %v252
  %v344 = vunpack.c.l.b16 %v253
  %v345 = vunpack.c.h.b16 %v253
  %v346 = vunpack.c.l.b16 %v254
  %v347 = vunpack.c.l.b16 %v255
  %v348 = vunpack.c.h.b16 %v255
  %v349 = vunpack.c.l.b16 %v256
  %v350 = vunpack.c.l.b16 %v257
  %v351 = vunpack.c.h.b16 %v257
  %v352 = vunpack.c.l.b16 %v258
  %v353 = vunpack.c.l.b16 %v259
  %v354 = vunpack.c.h.b16 %v259
  %v355 = vunpack.c.l.b16 %v260
  %v356 = vunpack.c.l.b16 %v261
  %v357 = vunpack.c.h.b16 %v261
  %v358 = vunpack.c.l.b16 %v262
  %v359 = vpack.c.b16 %v314, %v311
  %v360 = vpack.c.b16 %v315, %v312
  %v361 = vpack.c.b16 %v316, %v313
  %v362 = vpack.c.b16 %v320, %v317
  %v363 = vpack.c.b16 %v321, %v318
  %v364 = vpack.c.b16 %v322, %v319
  %v365 = vpack.c.b16 %v326, %v323
  %v366 = vpack.c.b16 %v327, %v324
  %v367 = vpack.c.b16 %v328, %v325
  %v368 = vpack.c.b16 %v332, %v329
  %v369 = vpack.c.b16 %v333, %v330
  %v370 = vpack.c.b16 %v334, %v331
  %v371 = vpack.c.b16 %v338, %v335
  %v372 = vpack.c.b16 %v339, %v336
  %v373 = vpack.c.b16 %v340, %v337
  %v374 = vpack.c.b16 %v344, %v341
  %v375 = vpack.c.b16 %v345, %v342
  %v376 = vpack.c.b16 %v346, %v343
  %v377 = vpack.c.b16 %v350, %v347
  %v378 = vpack.c.b16 %v351, %v348
  %v379 = vpack.c.b16 %v352, %v349
  %v380 = vpack.c.b16 %v356, %v353
  %v381 = vpack.c.b16 %v357, %v354
  %v382 = vpack.c.b16 %v358, %v355
  %407 = vmatprep.subr.bf16.mxu0 %v381
  %408 = vmatpush1.bf16.msra.mxu0 %v380
  %409 = vmatprep.subr.bf16.mxu0 %v378
  %410 = vmatpush1.bf16.msra.mxu0 %v377
  %411 = vmatprep.subr.bf16.mxu0 %v375
  %412 = vmatpush1.bf16.msra.mxu0 %v374
  %413 = vmatprep.subr.bf16.mxu0 %v372
  %414 = vmatpush1.bf16.msra.mxu0 %v371
  %415 = vmatprep.subr.bf16.mxu0 %v369
  %416 = vmatpush1.bf16.msra.mxu0 %v368
  %417 = vmatprep.subr.bf16.mxu0 %v366
  %418 = vmatpush1.bf16.msra.mxu0 %v365
  %419 = vmatprep.subr.bf16.mxu0 %v363
  %420 = vmatpush1.bf16.msra.mxu0 %v362
  %421 = vmatprep.subr.bf16.mxu0 %v360
  %422 = vmatpush1.bf16.msra.mxu0 %v359
  %423 = vmatprep.subr.bf16.mxu0 0
  %424 = vmatpush2.bf16.msra.mxu0 0
  %425 = vmatprep.subr.bf16.mxu0 0
  %426 = vmatpush2.bf16.msra.mxu0 0
  %427 = vmatprep.subr.bf16.mxu0 0
  %428 = vmatpush2.bf16.msra.mxu0 0
  %429 = vmatprep.subr.bf16.mxu0 0
  %430 = vmatpush2.bf16.msra.mxu0 0
  %431 = vmatprep.subr.bf16.mxu0 0
  %432 = vmatpush2.bf16.msra.mxu0 0
  %433 = vmatprep.subr.bf16.mxu0 0
  %434 = vmatpush2.bf16.msra.mxu0 0
  %435 = vmatprep.subr.bf16.mxu0 0
  %436 = vmatpush2.bf16.msra.mxu0 0
  %437 = vmatprep.subr.bf16.mxu0 0
  %438 = vmatpush2.bf16.msra.mxu0 0
  %439 = vmatprep.mubr.bf16.mxu0 0
  %440 = vmatmul.mubr.bf16.gmra.mxu0 %v230
  %v441 = vpop.f32.mrf.mxu0
  %v442 = vadd.f32 %v267, %v441
  %v443 = vpop.f32.mrf.mxu0
  %v444 = vadd.f32 %v271, %v443
  %v445 = vpop.f32.mrf.mxu0
  %v446 = vpop.f32.mrf.mxu0
  %447 = vdwg.mxu0
  %448 = vmatprep.subr.bf16.mxu0 0
  %449 = vmatpush1.bf16.msra.mxu0 %v382
  %450 = vmatprep.subr.bf16.mxu0 0
  %451 = vmatpush1.bf16.msra.mxu0 %v379
  %452 = vmatprep.subr.bf16.mxu0 0
  %453 = vmatpush1.bf16.msra.mxu0 %v376
  %454 = vmatprep.subr.bf16.mxu0 0
  %455 = vmatpush1.bf16.msra.mxu0 %v373
  %456 = vmatprep.subr.bf16.mxu0 0
  %457 = vmatpush1.bf16.msra.mxu0 %v370
  %458 = vmatprep.subr.bf16.mxu0 0
  %459 = vmatpush1.bf16.msra.mxu0 %v367
  %460 = vmatprep.subr.bf16.mxu0 0
  %461 = vmatpush1.bf16.msra.mxu0 %v364
  %462 = vmatprep.subr.bf16.mxu0 0
  %463 = vmatpush1.bf16.msra.mxu0 %v361
  %464 = vmatprep.subr.bf16.mxu0 0
  %465 = vmatpush2.bf16.msra.mxu0 0
  %466 = vmatprep.subr.bf16.mxu0 0
  %467 = vmatpush2.bf16.msra.mxu0 0
  %468 = vmatprep.subr.bf16.mxu0 0
  %469 = vmatpush2.bf16.msra.mxu0 0
  %470 = vmatprep.subr.bf16.mxu0 0
  %471 = vmatpush2.bf16.msra.mxu0 0
  %472 = vmatprep.subr.bf16.mxu0 0
  %473 = vmatpush2.bf16.msra.mxu0 0
  %474 = vmatprep.subr.bf16.mxu0 0
  %475 = vmatpush2.bf16.msra.mxu0 0
  %476 = vmatprep.subr.bf16.mxu0 0
  %477 = vmatpush2.bf16.msra.mxu0 0
  %478 = vmatprep.subr.bf16.mxu0 0
  %479 = vmatpush2.bf16.msra.mxu0 0
  %480 = vmatprep.mubr.bf16.mxu0 0
  %481 = vmatmul.mubr.bf16.gmra.mxu0 %v230
  %v482 = vpop.f32.mrf.mxu0
  %v483 = vadd.f32 %v275, %v482
  %v484 = vpop.f32.mrf.mxu0
  %v485 = vpop.f32.mrf.mxu0
  %v486 = vpop.f32.mrf.mxu0
  %487 = vdwg.mxu0
  %vm488 = vcmp.gt.f32.partialorder %v442, 0.0
  %vm489 = vcmp.gt.f32.partialorder %v444, 0.0
  %vm490 = vcmp.gt.f32.partialorder %v483, 0.0
  %v491 = vmul.f32 %v442, 0.01
  %v492 = vmul.f32 %v444, 0.01
  %v493 = vmul.f32 %v483, 0.01
  %v494 = vsel %vm488, %v442, %v491
  %v495 = vsel %vm489, %v444, %v492
  %v496 = vsel %vm490, %v483, %v493
  %v497 = vpack.c.bf16 %v228, %v228
  %498 = vmatprep.subr.bf16.mxu0 %v381
  %499 = vmatpush1.bf16.msra.mxu0 %v380
  %500 = vmatprep.subr.bf16.mxu0 %v378
  %501 = vmatpush1.bf16.msra.mxu0 %v377
  %502 = vmatprep.subr.bf16.mxu0 %v375
  %503 = vmatpush1.bf16.msra.mxu0 %v374
  %504 = vmatprep.subr.bf16.mxu0 %v372
  %505 = vmatpush1.bf16.msra.mxu0 %v371
  %506 = vmatprep.subr.bf16.mxu0 %v369
  %507 = vmatpush1.bf16.msra.mxu0 %v368
  %508 = vmatprep.subr.bf16.mxu0 %v366
  %509 = vmatpush1.bf16.msra.mxu0 %v365
  %510 = vmatprep.subr.bf16.mxu0 %v363
  %511 = vmatpush1.bf16.msra.mxu0 %v362
  %512 = vmatprep.subr.bf16.mxu0 %v360
  %513 = vmatpush1.bf16.msra.mxu0 %v359
  %514 = vmatprep.subr.bf16.mxu0 0
  %515 = vmatpush2.bf16.msra.mxu0 0
  %516 = vmatprep.subr.bf16.mxu0 0
  %517 = vmatpush2.bf16.msra.mxu0 0
  %518 = vmatprep.subr.bf16.mxu0 0
  %519 = vmatpush2.bf16.msra.mxu0 0
  %520 = vmatprep.subr.bf16.mxu0 0
  %521 = vmatpush2.bf16.msra.mxu0 0
  %522 = vmatprep.subr.bf16.mxu0 0
  %523 = vmatpush2.bf16.msra.mxu0 0
  %524 = vmatprep.subr.bf16.mxu0 0
  %525 = vmatpush2.bf16.msra.mxu0 0
  %526 = vmatprep.subr.bf16.mxu0 0
  %527 = vmatpush2.bf16.msra.mxu0 0
  %528 = vmatprep.subr.bf16.mxu0 0
  %529 = vmatpush2.bf16.msra.mxu0 0
  %530 = vmatprep.mubr.bf16.mxu0 0
  %531 = vmatmul.mubr.bf16.gmra.mxu0 %v497
  %v532 = vpop.f32.mrf.mxu0
  %v533 = vadd.f32 %v267, %v532
  %v534 = vpop.f32.mrf.mxu0
  %v535 = vadd.f32 %v271, %v534
  %v536 = vpop.f32.mrf.mxu0
  %v537 = vpop.f32.mrf.mxu0
  %538 = vdwg.mxu0
  %539 = vmatprep.subr.bf16.mxu0 0
  %540 = vmatpush1.bf16.msra.mxu0 %v382
  %541 = vmatprep.subr.bf16.mxu0 0
  %542 = vmatpush1.bf16.msra.mxu0 %v379
  %543 = vmatprep.subr.bf16.mxu0 0
  %544 = vmatpush1.bf16.msra.mxu0 %v376
  %545 = vmatprep.subr.bf16.mxu0 0
  %546 = vmatpush1.bf16.msra.mxu0 %v373
  %547 = vmatprep.subr.bf16.mxu0 0
  %548 = vmatpush1.bf16.msra.mxu0 %v370
  %549 = vmatprep.subr.bf16.mxu0 0
  %550 = vmatpush1.bf16.msra.mxu0 %v367
  %551 = vmatprep.subr.bf16.mxu0 0
  %552 = vmatpush1.bf16.msra.mxu0 %v364
  %553 = vmatprep.subr.bf16.mxu0 0
  %554 = vmatpush1.bf16.msra.mxu0 %v361
  %555 = vmatprep.subr.bf16.mxu0 0
  %556 = vmatpush2.bf16.msra.mxu0 0
  %557 = vmatprep.subr.bf16.mxu0 0
  %558 = vmatpush2.bf16.msra.mxu0 0
  %559 = vmatprep.subr.bf16.mxu0 0
  %560 = vmatpush2.bf16.msra.mxu0 0
  %561 = vmatprep.subr.bf16.mxu0 0
  %562 = vmatpush2.bf16.msra.mxu0 0
  %563 = vmatprep.subr.bf16.mxu0 0
  %564 = vmatpush2.bf16.msra.mxu0 0
  %565 = vmatprep.subr.bf16.mxu0 0
  %566 = vmatpush2.bf16.msra.mxu0 0
  %567 = vmatprep.subr.bf16.mxu0 0
  %568 = vmatpush2.bf16.msra.mxu0 0
  %569 = vmatprep.subr.bf16.mxu0 0
  %570 = vmatpush2.bf16.msra.mxu0 0
  %571 = vmatprep.mubr.bf16.mxu0 0
  %572 = vmatmul.mubr.bf16.gmra.mxu0 %v497
  %v573 = vpop.f32.mrf.mxu0
  %v574 = vadd.f32 %v275, %v573
  %v575 = vpop.f32.mrf.mxu0
  %v576 = vpop.f32.mrf.mxu0
  %v577 = vpop.f32.mrf.mxu0
  %578 = vdwg.mxu0
  %vm579 = vcmp.gt.f32.partialorder %v533, 0.0
  %vm580 = vcmp.gt.f32.partialorder %v535, 0.0
  %vm581 = vcmp.gt.f32.partialorder %v574, 0.0
  %v582 = vmul.f32 %v533, 0.01
  %v583 = vmul.f32 %v535, 0.01
  %v584 = vmul.f32 %v574, 0.01
  %v585 = vsel %vm579, %v533, %v582
  %v586 = vsel %vm580, %v535, %v583
  %v587 = vsel %vm581, %v574, %v584
  %v588 = vpack.c.bf16 %v494, %v494
  %v589 = vpack.c.bf16 %v495, %v495
  %v590 = vpack.c.bf16 %v496, %v496
  %v591 = vpack.c.bf16 %v585, %v585
  %v592 = vpack.c.bf16 %v586, %v586
  %v593 = vpack.c.bf16 %v587, %v587
  %v594 = vld [vmem:[%s3] sm:$0xff]
  %v595 = vld [vmem:[%s3 + $0x8] sm:$0xff]
  %v596 = vld [vmem:[%s3 + $0x10] sm:$0xff]
  %v597 = vld [vmem:[%s3 + $0x18] sm:$0xff]
  %v598 = vld [vmem:[%s3 + $0x20] sm:$0xff]
  %v599 = vld [vmem:[%s3 + $0x28] sm:$0xff]
  %v600 = vld [vmem:[%s3 + $0x30] sm:$0xff]
  %v601 = vld [vmem:[%s3 + $0x38] sm:$0xff]
  %v602 = vld [vmem:[%s3 + $0x40] sm:$0xff]
  %v603 = vld [vmem:[%s3 + $0x48] sm:$0xff]
  %v604 = vld [vmem:[%s3 + $0x50] sm:$0xff]
  %v605 = vld [vmem:[%s3 + $0x58] sm:$0xff]
  %v606 = vld [vmem:[%s3 + $0x60] sm:$0xff]
  %v607 = vld [vmem:[%s3 + $0x68] sm:$0xff]
  %v608 = vld [vmem:[%s3 + $0x70] sm:$0xff]
  %v609 = vld [vmem:[%s3 + $0x78] sm:$0xff]
  %v610 = vld [vmem:[%s3 + $0x80] sm:$0xff]
  %v611 = vld [vmem:[%s3 + $0x88] sm:$0xff]
  %v612 = vld [vmem:[%s3 + $0x90] sm:$0xff]
  %v613 = vld [vmem:[%s3 + $0x98] sm:$0xff]
  %v614 = vld [vmem:[%s3 + $0xa0] sm:$0xff]
  %v615 = vld [vmem:[%s3 + $0xa8] sm:$0xff]
  %v616 = vld [vmem:[%s3 + $0xb0] sm:$0xff]
  %v617 = vld [vmem:[%s3 + $0xb8] sm:$0xff]
  %v618 = vld [vmem:[%s3 + $0xc0] sm:$0xff]
  %v619 = vld [vmem:[%s3 + $0xc8] sm:$0xff]
  %v620 = vld [vmem:[%s3 + $0xd0] sm:$0xff]
  %v621 = vld [vmem:[%s3 + $0xd8] sm:$0xff]
  %v622 = vld [vmem:[%s3 + $0xe0] sm:$0xff]
  %v623 = vld [vmem:[%s3 + $0xe8] sm:$0xff]
  %v624 = vld [vmem:[%s3 + $0xf0] sm:$0xff]
  %v625 = vld [vmem:[%s3 + $0xf8] sm:$0xff]
  %v626 = vld [vmem:[%s3 + $0x100] sm:$0xff]
  %v627 = vld [vmem:[%s3 + $0x108] sm:$0xff]
  %v628 = vld [vmem:[%s3 + $0x110] sm:$0xff]
  %v629 = vld [vmem:[%s3 + $0x118] sm:$0xff]
  %v630 = vld [vmem:[%s3 + $0x120] sm:$0xff]
  %v631 = vld [vmem:[%s3 + $0x128] sm:$0xff]
  %v632 = vld [vmem:[%s3 + $0x130] sm:$0xff]
  %v633 = vld [vmem:[%s3 + $0x138] sm:$0xff]
  %v634 = vld [vmem:[%s3 + $0x140] sm:$0xff]
  %v635 = vld [vmem:[%s3 + $0x148] sm:$0xff]
  %v636 = vld [vmem:[%s3 + $0x150] sm:$0xff]
  %v637 = vld [vmem:[%s3 + $0x158] sm:$0xff]
  %v638 = vld [vmem:[%s3 + $0x160] sm:$0xff]
  %v639 = vld [vmem:[%s3 + $0x168] sm:$0xff]
  %v640 = vld [vmem:[%s3 + $0x170] sm:$0xff]
  %v641 = vld [vmem:[%s3 + $0x178] sm:$0xff]
  %v642 = vld [vmem:[%s3 + $0x180] sm:$0xff]
  %v643 = vld [vmem:[%s3 + $0x188] sm:$0xff]
  %v644 = vld [vmem:[%s3 + $0x190] sm:$0xff]
  %v645 = vld [vmem:[%s3 + $0x198] sm:$0xff]
  %v646 = vld [vmem:[%s3 + $0x1a0] sm:$0xff]
  %v647 = vld [vmem:[%s3 + $0x1a8] sm:$0xff]
  %v648 = vld [vmem:[%s3 + $0x1b0] sm:$0xff]
  %v649 = vld [vmem:[%s3 + $0x1b8] sm:$0xff]
  %v650 = vld [vmem:[%s3 + $0x1c0] sm:$0xff]
  %v651 = vld [vmem:[%s3 + $0x1c8] sm:$0xff]
  %v652 = vld [vmem:[%s3 + $0x1d0] sm:$0xff]
  %v653 = vld [vmem:[%s3 + $0x1d8] sm:$0xff]
  %v654 = vld [vmem:[%s3 + $0x1e0] sm:$0xff]
  %v655 = vld [vmem:[%s3 + $0x1e8] sm:$0xff]
  %v656 = vld [vmem:[%s3 + $0x1f0] sm:$0xff]
  %v657 = vld [vmem:[%s3 + $0x1f8] sm:$0xff]
  %v658 = vld [vmem:[%s3 + $0x200] sm:$0xff]
  %v659 = vld [vmem:[%s3 + $0x208] sm:$0xff]
  %v660 = vld [vmem:[%s3 + $0x210] sm:$0xff]
  %v661 = vld [vmem:[%s3 + $0x218] sm:$0xff]
  %v662 = vld [vmem:[%s3 + $0x220] sm:$0xff]
  %v663 = vld [vmem:[%s3 + $0x228] sm:$0xff]
  %v664 = vld [vmem:[%s3 + $0x230] sm:$0xff]
  %v665 = vld [vmem:[%s3 + $0x238] sm:$0xff]
  %v666 = vld [vmem:[%s3 + $0x240] sm:$0xff]
  %v667 = vld [vmem:[%s3 + $0x248] sm:$0xff]
  %v668 = vld [vmem:[%s3 + $0x250] sm:$0xff]
  %v669 = vld [vmem:[%s3 + $0x258] sm:$0xff]
  %v670 = vld [vmem:[%s3 + $0x260] sm:$0xff]
  %v671 = vld [vmem:[%s3 + $0x268] sm:$0xff]
  %v672 = vld [vmem:[%s3 + $0x270] sm:$0xff]
  %v673 = vld [vmem:[%s3 + $0x278] sm:$0xff]
  %v674 = vld [vmem:[%s3 + $0x280] sm:$0xff]
  %v675 = vld [vmem:[%s3 + $0x288] sm:$0xff]
  %v676 = vld [vmem:[%s3 + $0x290] sm:$0xff]
  %v677 = vld [vmem:[%s3 + $0x298] sm:$0xff]
  %v678 = vld [vmem:[%s3 + $0x2a0] sm:$0xff]
  %v679 = vld [vmem:[%s3 + $0x2a8] sm:$0xff]
  %v680 = vld [vmem:[%s3 + $0x2b0] sm:$0xff]
  %v681 = vld [vmem:[%s3 + $0x2b8] sm:$0xff]
  %v682 = vld [vmem:[%s3 + $0x2c0] sm:$0xff]
  %v683 = vld [vmem:[%s3 + $0x2c8] sm:$0xff]
  %v684 = vld [vmem:[%s3 + $0x2d0] sm:$0xff]
  %v685 = vld [vmem:[%s3 + $0x2d8] sm:$0xff]
  %v686 = vld [vmem:[%s3 + $0x2e0] sm:$0xff]
  %v687 = vld [vmem:[%s3 + $0x2e8] sm:$0xff]
  %v688 = vld [vmem:[%s3 + $0x2f0] sm:$0xff]
  %v689 = vld [vmem:[%s3 + $0x2f8] sm:$0xff]
  %v690 = vld [vmem:[%s3 + $0x300] sm:$0xff]
  %v691 = vld [vmem:[%s3 + $0x308] sm:$0xff]
  %v692 = vld [vmem:[%s3 + $0x310] sm:$0xff]
  %v693 = vld [vmem:[%s3 + $0x318] sm:$0xff]
  %v694 = vld [vmem:[%s3 + $0x320] sm:$0xff]
  %v695 = vld [vmem:[%s3 + $0x328] sm:$0xff]
  %v696 = vld [vmem:[%s3 + $0x330] sm:$0xff]
  %v697 = vld [vmem:[%s3 + $0x338] sm:$0xff]
  %v698 = vld [vmem:[%s3 + $0x340] sm:$0xff]
  %v699 = vld [vmem:[%s3 + $0x348] sm:$0xff]
  %v700 = vld [vmem:[%s3 + $0x350] sm:$0xff]
  %v701 = vld [vmem:[%s3 + $0x358] sm:$0xff]
  %v702 = vld [vmem:[%s3 + $0x360] sm:$0xff]
  %v703 = vld [vmem:[%s3 + $0x368] sm:$0xff]
  %v704 = vld [vmem:[%s3 + $0x370] sm:$0xff]
  %v705 = vld [vmem:[%s3 + $0x378] sm:$0xff]
  %v706 = vld [vmem:[%s3 + $0x380] sm:$0xff]
  %v707 = vld [vmem:[%s3 + $0x388] sm:$0xff]
  %v708 = vld [vmem:[%s3 + $0x390] sm:$0xff]
  %v709 = vld [vmem:[%s3 + $0x398] sm:$0xff]
  %v710 = vld [vmem:[%s3 + $0x3a0] sm:$0xff]
  %v711 = vld [vmem:[%s3 + $0x3a8] sm:$0xff]
  %v712 = vld [vmem:[%s3 + $0x3b0] sm:$0xff]
  %v713 = vld [vmem:[%s3 + $0x3b8] sm:$0xff]
  %v714 = vld [vmem:[%s3 + $0x3c0] sm:$0xff]
  %v715 = vld [vmem:[%s3 + $0x3c8] sm:$0xff]
  %v716 = vld [vmem:[%s3 + $0x3d0] sm:$0xff]
  %v717 = vld [vmem:[%s3 + $0x3d8] sm:$0xff]
  %v718 = vld [vmem:[%s3 + $0x3e0] sm:$0xff]
  %v719 = vld [vmem:[%s3 + $0x3e8] sm:$0xff]
  %v720 = vld [vmem:[%s3 + $0x3f0] sm:$0xff]
  %v721 = vld [vmem:[%s3 + $0x3f8] sm:$0xff]
  %v722 = vld [vmem:[%s3 + $0x400] sm:$0xff]
  %v723 = vld [vmem:[%s3 + $0x408] sm:$0xff]
  %v724 = vld [vmem:[%s3 + $0x410] sm:$0xff]
  %v725 = vld [vmem:[%s3 + $0x418] sm:$0xff]
  %v726 = vld [vmem:[%s3 + $0x420] sm:$0xff]
  %v727 = vld [vmem:[%s3 + $0x428] sm:$0xff]
  %v728 = vld [vmem:[%s3 + $0x430] sm:$0xff]
  %v729 = vld [vmem:[%s3 + $0x438] sm:$0xff]
  %v730 = vld [vmem:[%s3 + $0x440] sm:$0xff]
  %v731 = vld [vmem:[%s3 + $0x448] sm:$0xff]
  %v732 = vld [vmem:[%s3 + $0x450] sm:$0xff]
  %v733 = vld [vmem:[%s3 + $0x458] sm:$0xff]
  %v734 = vld [vmem:[%s3 + $0x460] sm:$0xff]
  %v735 = vld [vmem:[%s3 + $0x468] sm:$0xff]
  %v736 = vld [vmem:[%s3 + $0x470] sm:$0xff]
  %v737 = vld [vmem:[%s3 + $0x478] sm:$0xff]
  %v738 = vld [vmem:[%s3 + $0x480] sm:$0xff]
  %v739 = vld [vmem:[%s3 + $0x488] sm:$0xff]
  %v740 = vld [vmem:[%s3 + $0x490] sm:$0xff]
  %v741 = vld [vmem:[%s3 + $0x498] sm:$0xff]
  %v742 = vld [vmem:[%s3 + $0x4a0] sm:$0xff]
  %v743 = vld [vmem:[%s3 + $0x4a8] sm:$0xff]
  %v744 = vld [vmem:[%s3 + $0x4b0] sm:$0xff]
  %v745 = vld [vmem:[%s3 + $0x4b8] sm:$0xff]
  %v746 = vld [vmem:[%s3 + $0x4c0] sm:$0xff]
  %v747 = vld [vmem:[%s3 + $0x4c8] sm:$0xff]
  %v748 = vld [vmem:[%s3 + $0x4d0] sm:$0xff]
  %v749 = vld [vmem:[%s3 + $0x4d8] sm:$0xff]
  %v750 = vld [vmem:[%s3 + $0x4e0] sm:$0xff]
  %v751 = vld [vmem:[%s3 + $0x4e8] sm:$0xff]
  %v752 = vld [vmem:[%s3 + $0x4f0] sm:$0xff]
  %v753 = vld [vmem:[%s3 + $0x4f8] sm:$0xff]
  %v834 = vunpack.c.l.b16 %v674
  %v835 = vunpack.c.h.b16 %v674
  %v836 = vunpack.c.l.b16 %v675
  %v837 = vunpack.c.h.b16 %v675
  %v838 = vunpack.c.l.b16 %v676
  %v839 = vunpack.c.h.b16 %v676
  %v840 = vunpack.c.l.b16 %v677
  %v841 = vunpack.c.h.b16 %v677
  %v842 = vunpack.c.l.b16 %v678
  %v843 = vunpack.c.h.b16 %v678
  %v844 = vunpack.c.l.b16 %v679
  %v845 = vunpack.c.h.b16 %v679
  %v846 = vunpack.c.l.b16 %v680
  %v847 = vunpack.c.h.b16 %v680
  %v848 = vunpack.c.l.b16 %v681
  %v849 = vunpack.c.h.b16 %v681
  %v850 = vunpack.c.l.b16 %v682
  %v851 = vunpack.c.h.b16 %v682
  %v852 = vunpack.c.l.b16 %v683
  %v853 = vunpack.c.h.b16 %v683
  %v854 = vunpack.c.l.b16 %v684
  %v855 = vunpack.c.h.b16 %v684
  %v856 = vunpack.c.l.b16 %v685
  %v857 = vunpack.c.h.b16 %v685
  %v858 = vunpack.c.l.b16 %v686
  %v859 = vunpack.c.h.b16 %v686
  %v860 = vunpack.c.l.b16 %v687
  %v861 = vunpack.c.h.b16 %v687
  %v862 = vunpack.c.l.b16 %v688
  %v863 = vunpack.c.h.b16 %v688
  %v864 = vunpack.c.l.b16 %v689
  %v865 = vunpack.c.h.b16 %v689
  %v866 = vunpack.c.l.b16 %v690
  %v867 = vunpack.c.h.b16 %v690
  %v868 = vunpack.c.l.b16 %v691
  %v869 = vunpack.c.h.b16 %v691
  %v870 = vunpack.c.l.b16 %v692
  %v871 = vunpack.c.h.b16 %v692
  %v872 = vunpack.c.l.b16 %v693
  %v873 = vunpack.c.h.b16 %v693
  %v874 = vunpack.c.l.b16 %v694
  %v875 = vunpack.c.h.b16 %v694
  %v876 = vunpack.c.l.b16 %v695
  %v877 = vunpack.c.h.b16 %v695
  %v878 = vunpack.c.l.b16 %v696
  %v879 = vunpack.c.h.b16 %v696
  %v880 = vunpack.c.l.b16 %v697
  %v881 = vunpack.c.h.b16 %v697
  %v882 = vunpack.c.l.b16 %v698
  %v883 = vunpack.c.h.b16 %v698
  %v884 = vunpack.c.l.b16 %v699
  %v885 = vunpack.c.h.b16 %v699
  %v886 = vunpack.c.l.b16 %v700
  %v887 = vunpack.c.h.b16 %v700
  %v888 = vunpack.c.l.b16 %v701
  %v889 = vunpack.c.h.b16 %v701
  %v890 = vunpack.c.l.b16 %v702
  %v891 = vunpack.c.h.b16 %v702
  %v892 = vunpack.c.l.b16 %v703
  %v893 = vunpack.c.h.b16 %v703
  %v894 = vunpack.c.l.b16 %v704
  %v895 = vunpack.c.h.b16 %v704
  %v896 = vunpack.c.l.b16 %v705
  %v897 = vunpack.c.h.b16 %v705
  %v898 = vunpack.c.l.b16 %v706
  %v899 = vunpack.c.h.b16 %v706
  %v900 = vunpack.c.l.b16 %v707
  %v901 = vunpack.c.h.b16 %v707
  %v902 = vunpack.c.l.b16 %v708
  %v903 = vunpack.c.h.b16 %v708
  %v904 = vunpack.c.l.b16 %v709
  %v905 = vunpack.c.h.b16 %v709
  %v906 = vunpack.c.l.b16 %v710
  %v907 = vunpack.c.h.b16 %v710
  %v908 = vunpack.c.l.b16 %v711
  %v909 = vunpack.c.h.b16 %v711
  %v910 = vunpack.c.l.b16 %v712
  %v911 = vunpack.c.h.b16 %v712
  %v912 = vunpack.c.l.b16 %v713
  %v913 = vunpack.c.h.b16 %v713
  %v914 = vunpack.c.l.b16 %v714
  %v915 = vunpack.c.h.b16 %v714
  %v916 = vunpack.c.l.b16 %v715
  %v917 = vunpack.c.h.b16 %v715
  %v918 = vunpack.c.l.b16 %v716
  %v919 = vunpack.c.h.b16 %v716
  %v920 = vunpack.c.l.b16 %v717
  %v921 = vunpack.c.h.b16 %v717
  %v922 = vunpack.c.l.b16 %v718
  %v923 = vunpack.c.h.b16 %v718
  %v924 = vunpack.c.l.b16 %v719
  %v925 = vunpack.c.h.b16 %v719
  %v926 = vunpack.c.l.b16 %v720
  %v927 = vunpack.c.h.b16 %v720
  %v928 = vunpack.c.l.b16 %v721
  %v929 = vunpack.c.h.b16 %v721
  %v930 = vunpack.c.l.b16 %v722
  %v931 = vunpack.c.h.b16 %v722
  %v932 = vunpack.c.l.b16 %v723
  %v933 = vunpack.c.h.b16 %v723
  %v934 = vunpack.c.l.b16 %v724
  %v935 = vunpack.c.h.b16 %v724
  %v936 = vunpack.c.l.b16 %v725
  %v937 = vunpack.c.h.b16 %v725
  %v938 = vunpack.c.l.b16 %v726
  %v939 = vunpack.c.h.b16 %v726
  %v940 = vunpack.c.l.b16 %v727
  %v941 = vunpack.c.h.b16 %v727
  %v942 = vunpack.c.l.b16 %v728
  %v943 = vunpack.c.h.b16 %v728
  %v944 = vunpack.c.l.b16 %v729
  %v945 = vunpack.c.h.b16 %v729
  %v946 = vunpack.c.l.b16 %v730
  %v947 = vunpack.c.h.b16 %v730
  %v948 = vunpack.c.l.b16 %v731
  %v949 = vunpack.c.h.b16 %v731
  %v950 = vunpack.c.l.b16 %v732
  %v951 = vunpack.c.h.b16 %v732
  %v952 = vunpack.c.l.b16 %v733
  %v953 = vunpack.c.h.b16 %v733
  %v954 = vunpack.c.l.b16 %v734
  %v955 = vunpack.c.h.b16 %v734
  %v956 = vunpack.c.l.b16 %v735
  %v957 = vunpack.c.h.b16 %v735
  %v958 = vunpack.c.l.b16 %v736
  %v959 = vunpack.c.h.b16 %v736
  %v960 = vunpack.c.l.b16 %v737
  %v961 = vunpack.c.h.b16 %v737
  %v962 = vunpack.c.l.b16 %v738
  %v963 = vunpack.c.h.b16 %v738
  %v964 = vunpack.c.l.b16 %v739
  %v965 = vunpack.c.h.b16 %v739
  %v966 = vunpack.c.l.b16 %v740
  %v967 = vunpack.c.h.b16 %v740
  %v968 = vunpack.c.l.b16 %v741
  %v969 = vunpack.c.h.b16 %v741
  %v970 = vunpack.c.l.b16 %v742
  %v971 = vunpack.c.h.b16 %v742
  %v972 = vunpack.c.l.b16 %v743
  %v973 = vunpack.c.h.b16 %v743
  %v974 = vunpack.c.l.b16 %v744
  %v975 = vunpack.c.h.b16 %v744
  %v976 = vunpack.c.l.b16 %v745
  %v977 = vunpack.c.h.b16 %v745
  %v978 = vunpack.c.l.b16 %v746
  %v979 = vunpack.c.h.b16 %v746
  %v980 = vunpack.c.l.b16 %v747
  %v981 = vunpack.c.h.b16 %v747
  %v982 = vunpack.c.l.b16 %v748
  %v983 = vunpack.c.h.b16 %v748
  %v984 = vunpack.c.l.b16 %v749
  %v985 = vunpack.c.h.b16 %v749
  %v986 = vunpack.c.l.b16 %v750
  %v987 = vunpack.c.h.b16 %v750
  %v988 = vunpack.c.l.b16 %v751
  %v989 = vunpack.c.h.b16 %v751
  %v990 = vunpack.c.l.b16 %v752
  %v991 = vunpack.c.h.b16 %v752
  %v992 = vunpack.c.l.b16 %v753
  %v993 = vunpack.c.h.b16 %v753
  %v994 = vpack.c.b16 %v838, %v834
  %v995 = vpack.c.b16 %v839, %v835
  %v996 = vpack.c.b16 %v840, %v836
  %v997 = vpack.c.b16 %v841, %v837
  %v998 = vpack.c.b16 %v846, %v842
  %v999 = vpack.c.b16 %v847, %v843
  %v1000 = vpack.c.b16 %v848, %v844
  %v1001 = vpack.c.b16 %v849, %v845
  %v1002 = vpack.c.b16 %v854, %v850
  %v1003 = vpack.c.b16 %v855, %v851
  %v1004 = vpack.c.b16 %v856, %v852
  %v1005 = vpack.c.b16 %v857, %v853
  %v1006 = vpack.c.b16 %v862, %v858
  %v1007 = vpack.c.b16 %v863, %v859
  %v1008 = vpack.c.b16 %v864, %v860
  %v1009 = vpack.c.b16 %v865, %v861
  %v1010 = vpack.c.b16 %v870, %v866
  %v1011 = vpack.c.b16 %v871, %v867
  %v1012 = vpack.c.b16 %v872, %v868
  %v1013 = vpack.c.b16 %v873, %v869
  %v1014 = vpack.c.b16 %v878, %v874
  %v1015 = vpack.c.b16 %v879, %v875
  %v1016 = vpack.c.b16 %v880, %v876
  %v1017 = vpack.c.b16 %v881, %v877
  %v1018 = vpack.c.b16 %v886, %v882
  %v1019 = vpack.c.b16 %v887, %v883
  %v1020 = vpack.c.b16 %v888, %v884
  %v1021 = vpack.c.b16 %v889, %v885
  %v1022 = vpack.c.b16 %v894, %v890
  %v1023 = vpack.c.b16 %v895, %v891
  %v1024 = vpack.c.b16 %v896, %v892
  %v1025 = vpack.c.b16 %v897, %v893
  %v1026 = vpack.c.b16 %v902, %v898
  %v1027 = vpack.c.b16 %v903, %v899
  %v1028 = vpack.c.b16 %v904, %v900
  %v1029 = vpack.c.b16 %v905, %v901
  %v1030 = vpack.c.b16 %v910, %v906
  %v1031 = vpack.c.b16 %v911, %v907
  %v1032 = vpack.c.b16 %v912, %v908
  %v1033 = vpack.c.b16 %v913, %v909
  %v1034 = vpack.c.b16 %v918, %v914
  %v1035 = vpack.c.b16 %v919, %v915
  %v1036 = vpack.c.b16 %v920, %v916
  %v1037 = vpack.c.b16 %v921, %v917
  %v1038 = vpack.c.b16 %v926, %v922
  %v1039 = vpack.c.b16 %v927, %v923
  %v1040 = vpack.c.b16 %v928, %v924
  %v1041 = vpack.c.b16 %v929, %v925
  %v1042 = vpack.c.b16 %v934, %v930
  %v1043 = vpack.c.b16 %v935, %v931
  %v1044 = vpack.c.b16 %v936, %v932
  %v1045 = vpack.c.b16 %v937, %v933
  %v1046 = vpack.c.b16 %v942, %v938
  %v1047 = vpack.c.b16 %v943, %v939
  %v1048 = vpack.c.b16 %v944, %v940
  %v1049 = vpack.c.b16 %v945, %v941
  %v1050 = vpack.c.b16 %v950, %v946
  %v1051 = vpack.c.b16 %v951, %v947
  %v1052 = vpack.c.b16 %v952, %v948
  %v1053 = vpack.c.b16 %v953, %v949
  %v1054 = vpack.c.b16 %v958, %v954
  %v1055 = vpack.c.b16 %v959, %v955
  %v1056 = vpack.c.b16 %v960, %v956
  %v1057 = vpack.c.b16 %v961, %v957
  %v1058 = vpack.c.b16 %v966, %v962
  %v1059 = vpack.c.b16 %v967, %v963
  %v1060 = vpack.c.b16 %v968, %v964
  %v1061 = vpack.c.b16 %v969, %v965
  %v1062 = vpack.c.b16 %v974, %v970
  %v1063 = vpack.c.b16 %v975, %v971
  %v1064 = vpack.c.b16 %v976, %v972
  %v1065 = vpack.c.b16 %v977, %v973
  %v1066 = vpack.c.b16 %v982, %v978
  %v1067 = vpack.c.b16 %v983, %v979
  %v1068 = vpack.c.b16 %v984, %v980
  %v1069 = vpack.c.b16 %v985, %v981
  %v1070 = vpack.c.b16 %v990, %v986
  %v1071 = vpack.c.b16 %v991, %v987
  %v1072 = vpack.c.b16 %v992, %v988
  %v1073 = vpack.c.b16 %v993, %v989
  %vm1154 = vcmask 523264
  %v1156 = vsel %vm1154, %v593, 0
  %1158 = vmatprep.subr.bf16.mxu0 %v1023
  %1159 = vmatpush1.bf16.msra.mxu0 %v1022
  %1160 = vmatprep.subr.bf16.mxu0 %v1019
  %1161 = vmatpush1.bf16.msra.mxu0 %v1018
  %1162 = vmatprep.subr.bf16.mxu0 %v1015
  %1163 = vmatpush1.bf16.msra.mxu0 %v1014
  %1164 = vmatprep.subr.bf16.mxu0 %v1011
  %1165 = vmatpush1.bf16.msra.mxu0 %v1010
  %1166 = vmatprep.subr.bf16.mxu0 %v1007
  %1167 = vmatpush1.bf16.msra.mxu0 %v1006
  %1168 = vmatprep.subr.bf16.mxu0 %v1003
  %1169 = vmatpush1.bf16.msra.mxu0 %v1002
  %1170 = vmatprep.subr.bf16.mxu0 %v999
  %1171 = vmatpush1.bf16.msra.mxu0 %v998
  %1172 = vmatprep.subr.bf16.mxu0 %v995
  %1173 = vmatpush1.bf16.msra.mxu0 %v994
  %1174 = vmatprep.subr.bf16.mxu0 %v1055
  %1175 = vmatpush2.bf16.msra.mxu0 %v1054
  %1176 = vmatprep.subr.bf16.mxu0 %v1051
  %1177 = vmatpush2.bf16.msra.mxu0 %v1050
  %1178 = vmatprep.subr.bf16.mxu0 %v1047
  %1179 = vmatpush2.bf16.msra.mxu0 %v1046
  %1180 = vmatprep.subr.bf16.mxu0 %v1043
  %1181 = vmatpush2.bf16.msra.mxu0 %v1042
  %1182 = vmatprep.subr.bf16.mxu0 %v1039
  %1183 = vmatpush2.bf16.msra.mxu0 %v1038
  %1184 = vmatprep.subr.bf16.mxu0 %v1035
  %1185 = vmatpush2.bf16.msra.mxu0 %v1034
  %1186 = vmatprep.subr.bf16.mxu0 %v1031
  %1187 = vmatpush2.bf16.msra.mxu0 %v1030
  %1188 = vmatprep.subr.bf16.mxu0 %v1027
  %1189 = vmatpush2.bf16.msra.mxu0 %v1026
  %1190 = vmatprep.mubr.bf16.mxu0 %v592
  %1191 = vmatmul.mubr.bf16.gmra.mxu0 %v591
  %v1192 = vpop.f32.mrf.mxu0
  %v1193 = vadd.f32 0.0, %v1192
  %v1194 = vpop.f32.mrf.mxu0
  %v1195 = vadd.f32 0.0, %v1194
  %v1196 = vpop.f32.mrf.mxu0
  %v1197 = vpop.f32.mrf.mxu0
  %1198 = vdwg.mxu0
  %1199 = vmatprep.subr.bf16.mxu0 0
  %1200 = vmatpush1.bf16.msra.mxu0 0
  %1201 = vmatprep.subr.bf16.mxu0 0
  %1202 = vmatpush1.bf16.msra.mxu0 0
  %1203 = vmatprep.subr.bf16.mxu0 0
  %1204 = vmatpush1.bf16.msra.mxu0 0
  %1205 = vmatprep.subr.bf16.mxu0 0
  %1206 = vmatpush1.bf16.msra.mxu0 0
  %1207 = vmatprep.subr.bf16.mxu0 %v1071
  %1208 = vmatpush1.bf16.msra.mxu0 %v1070
  %1209 = vmatprep.subr.bf16.mxu0 %v1067
  %1210 = vmatpush1.bf16.msra.mxu0 %v1066
  %1211 = vmatprep.subr.bf16.mxu0 %v1063
  %1212 = vmatpush1.bf16.msra.mxu0 %v1062
  %1213 = vmatprep.subr.bf16.mxu0 %v1059
  %1214 = vmatpush1.bf16.msra.mxu0 %v1058
  %1215 = vmatprep.subr.bf16.mxu0 0
  %1216 = vmatpush2.bf16.msra.mxu0 0
  %1217 = vmatprep.subr.bf16.mxu0 0
  %1218 = vmatpush2.bf16.msra.mxu0 0
  %1219 = vmatprep.subr.bf16.mxu0 0
  %1220 = vmatpush2.bf16.msra.mxu0 0
  %1221 = vmatprep.subr.bf16.mxu0 0
  %1222 = vmatpush2.bf16.msra.mxu0 0
  %1223 = vmatprep.subr.bf16.mxu0 0
  %1224 = vmatpush2.bf16.msra.mxu0 0
  %1225 = vmatprep.subr.bf16.mxu0 0
  %1226 = vmatpush2.bf16.msra.mxu0 0
  %1227 = vmatprep.subr.bf16.mxu0 0
  %1228 = vmatpush2.bf16.msra.mxu0 0
  %1229 = vmatprep.subr.bf16.mxu0 0
  %1230 = vmatpush2.bf16.msra.mxu0 0
  %1231 = vmatprep.mubr.bf16.mxu0 0
  %1232 = vmatmul.mubr.bf16.gmra.mxu0 %v1156
  %v1233 = vpop.f32.mrf.mxu0
  %v1234 = vadd.f32 %v1193, %v1233
  %v1235 = vpop.f32.mrf.mxu0
  %v1236 = vadd.f32 %v1195, %v1235
  %v1237 = vpop.f32.mrf.mxu0
  %v1238 = vpop.f32.mrf.mxu0
  %1239 = vdwg.mxu0
  %1240 = vmatprep.subr.bf16.mxu0 %v1025
  %1241 = vmatpush1.bf16.msra.mxu0 %v1024
  %1242 = vmatprep.subr.bf16.mxu0 %v1021
  %1243 = vmatpush1.bf16.msra.mxu0 %v1020
  %1244 = vmatprep.subr.bf16.mxu0 %v1017
  %1245 = vmatpush1.bf16.msra.mxu0 %v1016
  %1246 = vmatprep.subr.bf16.mxu0 %v1013
  %1247 = vmatpush1.bf16.msra.mxu0 %v1012
  %1248 = vmatprep.subr.bf16.mxu0 %v1009
  %1249 = vmatpush1.bf16.msra.mxu0 %v1008
  %1250 = vmatprep.subr.bf16.mxu0 %v1005
  %1251 = vmatpush1.bf16.msra.mxu0 %v1004
  %1252 = vmatprep.subr.bf16.mxu0 %v1001
  %1253 = vmatpush1.bf16.msra.mxu0 %v1000
  %1254 = vmatprep.subr.bf16.mxu0 %v997
  %1255 = vmatpush1.bf16.msra.mxu0 %v996
  %1256 = vmatprep.subr.bf16.mxu0 %v1057
  %1257 = vmatpush2.bf16.msra.mxu0 %v1056
  %1258 = vmatprep.subr.bf16.mxu0 %v1053
  %1259 = vmatpush2.bf16.msra.mxu0 %v1052
  %1260 = vmatprep.subr.bf16.mxu0 %v1049
  %1261 = vmatpush2.bf16.msra.mxu0 %v1048
  %1262 = vmatprep.subr.bf16.mxu0 %v1045
  %1263 = vmatpush2.bf16.msra.mxu0 %v1044
  %1264 = vmatprep.subr.bf16.mxu0 %v1041
  %1265 = vmatpush2.bf16.msra.mxu0 %v1040
  %1266 = vmatprep.subr.bf16.mxu0 %v1037
  %1267 = vmatpush2.bf16.msra.mxu0 %v1036
  %1268 = vmatprep.subr.bf16.mxu0 %v1033
  %1269 = vmatpush2.bf16.msra.mxu0 %v1032
  %1270 = vmatprep.subr.bf16.mxu0 %v1029
  %1271 = vmatpush2.bf16.msra.mxu0 %v1028
  %1272 = vmatprep.mubr.bf16.mxu0 %v592
  %1273 = vmatmul.mubr.bf16.gmra.mxu0 %v591
  %v1274 = vpop.f32.mrf.mxu0
  %v1275 = vadd.f32 0.0, %v1274
  %v1276 = vpop.f32.mrf.mxu0
  %v1277 = vadd.f32 0.0, %v1276
  %v1278 = vpop.f32.mrf.mxu0
  %v1279 = vpop.f32.mrf.mxu0
  %1280 = vdwg.mxu0
  %1281 = vmatprep.subr.bf16.mxu0 0
  %1282 = vmatpush1.bf16.msra.mxu0 0
  %1283 = vmatprep.subr.bf16.mxu0 0
  %1284 = vmatpush1.bf16.msra.mxu0 0
  %1285 = vmatprep.subr.bf16.mxu0 0
  %1286 = vmatpush1.bf16.msra.mxu0 0
  %1287 = vmatprep.subr.bf16.mxu0 0
  %1288 = vmatpush1.bf16.msra.mxu0 0
  %1289 = vmatprep.subr.bf16.mxu0 %v1073
  %1290 = vmatpush1.bf16.msra.mxu0 %v1072
  %1291 = vmatprep.subr.bf16.mxu0 %v1069
  %1292 = vmatpush1.bf16.msra.mxu0 %v1068
  %1293 = vmatprep.subr.bf16.mxu0 %v1065
  %1294 = vmatpush1.bf16.msra.mxu0 %v1064
  %1295 = vmatprep.subr.bf16.mxu0 %v1061
  %1296 = vmatpush1.bf16.msra.mxu0 %v1060
  %1297 = vmatprep.subr.bf16.mxu0 0
  %1298 = vmatpush2.bf16.msra.mxu0 0
  %1299 = vmatprep.subr.bf16.mxu0 0
  %1300 = vmatpush2.bf16.msra.mxu0 0
  %1301 = vmatprep.subr.bf16.mxu0 0
  %1302 = vmatpush2.bf16.msra.mxu0 0
  %1303 = vmatprep.subr.bf16.mxu0 0
  %1304 = vmatpush2.bf16.msra.mxu0 0
  %1305 = vmatprep.subr.bf16.mxu0 0
  %1306 = vmatpush2.bf16.msra.mxu0 0
  %1307 = vmatprep.subr.bf16.mxu0 0
  %1308 = vmatpush2.bf16.msra.mxu0 0
  %1309 = vmatprep.subr.bf16.mxu0 0
  %1310 = vmatpush2.bf16.msra.mxu0 0
  %1311 = vmatprep.subr.bf16.mxu0 0
  %1312 = vmatpush2.bf16.msra.mxu0 0
  %1313 = vmatprep.mubr.bf16.mxu0 0
  %1314 = vmatmul.mubr.bf16.gmra.mxu0 %v1156
  %v1315 = vpop.f32.mrf.mxu0
  %v1316 = vadd.f32 %v1275, %v1315
  %v1317 = vpop.f32.mrf.mxu0
  %v1318 = vadd.f32 %v1277, %v1317
  %v1319 = vpop.f32.mrf.mxu0
  %v1320 = vpop.f32.mrf.mxu0
  %1321 = vdwg.mxu0
  %v1402 = vunpack.c.l.b16 %v594
  %v1403 = vunpack.c.h.b16 %v594
  %v1404 = vunpack.c.l.b16 %v595
  %v1405 = vunpack.c.h.b16 %v595
  %v1406 = vunpack.c.l.b16 %v596
  %v1407 = vunpack.c.h.b16 %v596
  %v1408 = vunpack.c.l.b16 %v597
  %v1409 = vunpack.c.h.b16 %v597
  %v1410 = vunpack.c.l.b16 %v598
  %v1411 = vunpack.c.h.b16 %v598
  %v1412 = vunpack.c.l.b16 %v599
  %v1413 = vunpack.c.h.b16 %v599
  %v1414 = vunpack.c.l.b16 %v600
  %v1415 = vunpack.c.h.b16 %v600
  %v1416 = vunpack.c.l.b16 %v601
  %v1417 = vunpack.c.h.b16 %v601
  %v1418 = vunpack.c.l.b16 %v602
  %v1419 = vunpack.c.h.b16 %v602
  %v1420 = vunpack.c.l.b16 %v603
  %v1421 = vunpack.c.h.b16 %v603
  %v1422 = vunpack.c.l.b16 %v604
  %v1423 = vunpack.c.h.b16 %v604
  %v1424 = vunpack.c.l.b16 %v605
  %v1425 = vunpack.c.h.b16 %v605
  %v1426 = vunpack.c.l.b16 %v606
  %v1427 = vunpack.c.h.b16 %v606
  %v1428 = vunpack.c.l.b16 %v607
  %v1429 = vunpack.c.h.b16 %v607
  %v1430 = vunpack.c.l.b16 %v608
  %v1431 = vunpack.c.h.b16 %v608
  %v1432 = vunpack.c.l.b16 %v609
  %v1433 = vunpack.c.h.b16 %v609
  %v1434 = vunpack.c.l.b16 %v610
  %v1435 = vunpack.c.h.b16 %v610
  %v1436 = vunpack.c.l.b16 %v611
  %v1437 = vunpack.c.h.b16 %v611
  %v1438 = vunpack.c.l.b16 %v612
  %v1439 = vunpack.c.h.b16 %v612
  %v1440 = vunpack.c.l.b16 %v613
  %v1441 = vunpack.c.h.b16 %v613
  %v1442 = vunpack.c.l.b16 %v614
  %v1443 = vunpack.c.h.b16 %v614
  %v1444 = vunpack.c.l.b16 %v615
  %v1445 = vunpack.c.h.b16 %v615
  %v1446 = vunpack.c.l.b16 %v616
  %v1447 = vunpack.c.h.b16 %v616
  %v1448 = vunpack.c.l.b16 %v617
  %v1449 = vunpack.c.h.b16 %v617
  %v1450 = vunpack.c.l.b16 %v618
  %v1451 = vunpack.c.h.b16 %v618
  %v1452 = vunpack.c.l.b16 %v619
  %v1453 = vunpack.c.h.b16 %v619
  %v1454 = vunpack.c.l.b16 %v620
  %v1455 = vunpack.c.h.b16 %v620
  %v1456 = vunpack.c.l.b16 %v621
  %v1457 = vunpack.c.h.b16 %v621
  %v1458 = vunpack.c.l.b16 %v622
  %v1459 = vunpack.c.h.b16 %v622
  %v1460 = vunpack.c.l.b16 %v623
  %v1461 = vunpack.c.h.b16 %v623
  %v1462 = vunpack.c.l.b16 %v624
  %v1463 = vunpack.c.h.b16 %v624
  %v1464 = vunpack.c.l.b16 %v625
  %v1465 = vunpack.c.h.b16 %v625
  %v1466 = vunpack.c.l.b16 %v626
  %v1467 = vunpack.c.h.b16 %v626
  %v1468 = vunpack.c.l.b16 %v627
  %v1469 = vunpack.c.h.b16 %v627
  %v1470 = vunpack.c.l.b16 %v628
  %v1471 = vunpack.c.h.b16 %v628
  %v1472 = vunpack.c.l.b16 %v629
  %v1473 = vunpack.c.h.b16 %v629
  %v1474 = vunpack.c.l.b16 %v630
  %v1475 = vunpack.c.h.b16 %v630
  %v1476 = vunpack.c.l.b16 %v631
  %v1477 = vunpack.c.h.b16 %v631
  %v1478 = vunpack.c.l.b16 %v632
  %v1479 = vunpack.c.h.b16 %v632
  %v1480 = vunpack.c.l.b16 %v633
  %v1481 = vunpack.c.h.b16 %v633
  %v1482 = vunpack.c.l.b16 %v634
  %v1483 = vunpack.c.h.b16 %v634
  %v1484 = vunpack.c.l.b16 %v635
  %v1485 = vunpack.c.h.b16 %v635
  %v1486 = vunpack.c.l.b16 %v636
  %v1487 = vunpack.c.h.b16 %v636
  %v1488 = vunpack.c.l.b16 %v637
  %v1489 = vunpack.c.h.b16 %v637
  %v1490 = vunpack.c.l.b16 %v638
  %v1491 = vunpack.c.h.b16 %v638
  %v1492 = vunpack.c.l.b16 %v639
  %v1493 = vunpack.c.h.b16 %v639
  %v1494 = vunpack.c.l.b16 %v640
  %v1495 = vunpack.c.h.b16 %v640
  %v1496 = vunpack.c.l.b16 %v641
  %v1497 = vunpack.c.h.b16 %v641
  %v1498 = vunpack.c.l.b16 %v642
  %v1499 = vunpack.c.h.b16 %v642
  %v1500 = vunpack.c.l.b16 %v643
  %v1501 = vunpack.c.h.b16 %v643
  %v1502 = vunpack.c.l.b16 %v644
  %v1503 = vunpack.c.h.b16 %v644
  %v1504 = vunpack.c.l.b16 %v645
  %v1505 = vunpack.c.h.b16 %v645
  %v1506 = vunpack.c.l.b16 %v646
  %v1507 = vunpack.c.h.b16 %v646
  %v1508 = vunpack.c.l.b16 %v647
  %v1509 = vunpack.c.h.b16 %v647
  %v1510 = vunpack.c.l.b16 %v648
  %v1511 = vunpack.c.h.b16 %v648
  %v1512 = vunpack.c.l.b16 %v649
  %v1513 = vunpack.c.h.b16 %v649
  %v1514 = vunpack.c.l.b16 %v650
  %v1515 = vunpack.c.h.b16 %v650
  %v1516 = vunpack.c.l.b16 %v651
  %v1517 = vunpack.c.h.b16 %v651
  %v1518 = vunpack.c.l.b16 %v652
  %v1519 = vunpack.c.h.b16 %v652
  %v1520 = vunpack.c.l.b16 %v653
  %v1521 = vunpack.c.h.b16 %v653
  %v1522 = vunpack.c.l.b16 %v654
  %v1523 = vunpack.c.h.b16 %v654
  %v1524 = vunpack.c.l.b16 %v655
  %v1525 = vunpack.c.h.b16 %v655
  %v1526 = vunpack.c.l.b16 %v656
  %v1527 = vunpack.c.h.b16 %v656
  %v1528 = vunpack.c.l.b16 %v657
  %v1529 = vunpack.c.h.b16 %v657
  %v1530 = vunpack.c.l.b16 %v658
  %v1531 = vunpack.c.h.b16 %v658
  %v1532 = vunpack.c.l.b16 %v659
  %v1533 = vunpack.c.h.b16 %v659
  %v1534 = vunpack.c.l.b16 %v660
  %v1535 = vunpack.c.h.b16 %v660
  %v1536 = vunpack.c.l.b16 %v661
  %v1537 = vunpack.c.h.b16 %v661
  %v1538 = vunpack.c.l.b16 %v662
  %v1539 = vunpack.c.h.b16 %v662
  %v1540 = vunpack.c.l.b16 %v663
  %v1541 = vunpack.c.h.b16 %v663
  %v1542 = vunpack.c.l.b16 %v664
  %v1543 = vunpack.c.h.b16 %v664
  %v1544 = vunpack.c.l.b16 %v665
  %v1545 = vunpack.c.h.b16 %v665
  %v1546 = vunpack.c.l.b16 %v666
  %v1547 = vunpack.c.h.b16 %v666
  %v1548 = vunpack.c.l.b16 %v667
  %v1549 = vunpack.c.h.b16 %v667
  %v1550 = vunpack.c.l.b16 %v668
  %v1551 = vunpack.c.h.b16 %v668
  %v1552 = vunpack.c.l.b16 %v669
  %v1553 = vunpack.c.h.b16 %v669
  %v1554 = vunpack.c.l.b16 %v670
  %v1555 = vunpack.c.h.b16 %v670
  %v1556 = vunpack.c.l.b16 %v671
  %v1557 = vunpack.c.h.b16 %v671
  %v1558 = vunpack.c.l.b16 %v672
  %v1559 = vunpack.c.h.b16 %v672
  %v1560 = vunpack.c.l.b16 %v673
  %v1561 = vunpack.c.h.b16 %v673
  %v1562 = vpack.c.b16 %v1406, %v1402
  %v1563 = vpack.c.b16 %v1407, %v1403
  %v1564 = vpack.c.b16 %v1408, %v1404
  %v1565 = vpack.c.b16 %v1409, %v1405
  %v1566 = vpack.c.b16 %v1414, %v1410
  %v1567 = vpack.c.b16 %v1415, %v1411
  %v1568 = vpack.c.b16 %v1416, %v1412
  %v1569 = vpack.c.b16 %v1417, %v1413
  %v1570 = vpack.c.b16 %v1422, %v1418
  %v1571 = vpack.c.b16 %v1423, %v1419
  %v1572 = vpack.c.b16 %v1424, %v1420
  %v1573 = vpack.c.b16 %v1425, %v1421
  %v1574 = vpack.c.b16 %v1430, %v1426
  %v1575 = vpack.c.b16 %v1431, %v1427
  %v1576 = vpack.c.b16 %v1432, %v1428
  %v1577 = vpack.c.b16 %v1433, %v1429
  %v1578 = vpack.c.b16 %v1438, %v1434
  %v1579 = vpack.c.b16 %v1439, %v1435
  %v1580 = vpack.c.b16 %v1440, %v1436
  %v1581 = vpack.c.b16 %v1441, %v1437
  %v1582 = vpack.c.b16 %v1446, %v1442
  %v1583 = vpack.c.b16 %v1447, %v1443
  %v1584 = vpack.c.b16 %v1448, %v1444
  %v1585 = vpack.c.b16 %v1449, %v1445
  %v1586 = vpack.c.b16 %v1454, %v1450
  %v1587 = vpack.c.b16 %v1455, %v1451
  %v1588 = vpack.c.b16 %v1456, %v1452
  %v1589 = vpack.c.b16 %v1457, %v1453
  %v1590 = vpack.c.b16 %v1462, %v1458
  %v1591 = vpack.c.b16 %v1463, %v1459
  %v1592 = vpack.c.b16 %v1464, %v1460
  %v1593 = vpack.c.b16 %v1465, %v1461
  %v1594 = vpack.c.b16 %v1470, %v1466
  %v1595 = vpack.c.b16 %v1471, %v1467
  %v1596 = vpack.c.b16 %v1472, %v1468
  %v1597 = vpack.c.b16 %v1473, %v1469
  %v1598 = vpack.c.b16 %v1478, %v1474
  %v1599 = vpack.c.b16 %v1479, %v1475
  %v1600 = vpack.c.b16 %v1480, %v1476
  %v1601 = vpack.c.b16 %v1481, %v1477
  %v1602 = vpack.c.b16 %v1486, %v1482
  %v1603 = vpack.c.b16 %v1487, %v1483
  %v1604 = vpack.c.b16 %v1488, %v1484
  %v1605 = vpack.c.b16 %v1489, %v1485
  %v1606 = vpack.c.b16 %v1494, %v1490
  %v1607 = vpack.c.b16 %v1495, %v1491
  %v1608 = vpack.c.b16 %v1496, %v1492
  %v1609 = vpack.c.b16 %v1497, %v1493
  %v1610 = vpack.c.b16 %v1502, %v1498
  %v1611 = vpack.c.b16 %v1503, %v1499
  %v1612 = vpack.c.b16 %v1504, %v1500
  %v1613 = vpack.c.b16 %v1505, %v1501
  %v1614 = vpack.c.b16 %v1510, %v1506
  %v1615 = vpack.c.b16 %v1511, %v1507
  %v1616 = vpack.c.b16 %v1512, %v1508
  %v1617 = vpack.c.b16 %v1513, %v1509
  %v1618 = vpack.c.b16 %v1518, %v1514
  %v1619 = vpack.c.b16 %v1519, %v1515
  %v1620 = vpack.c.b16 %v1520, %v1516
  %v1621 = vpack.c.b16 %v1521, %v1517
  %v1622 = vpack.c.b16 %v1526, %v1522
  %v1623 = vpack.c.b16 %v1527, %v1523
  %v1624 = vpack.c.b16 %v1528, %v1524
  %v1625 = vpack.c.b16 %v1529, %v1525
  %v1626 = vpack.c.b16 %v1534, %v1530
  %v1627 = vpack.c.b16 %v1535, %v1531
  %v1628 = vpack.c.b16 %v1536, %v1532
  %v1629 = vpack.c.b16 %v1537, %v1533
  %v1630 = vpack.c.b16 %v1542, %v1538
  %v1631 = vpack.c.b16 %v1543, %v1539
  %v1632 = vpack.c.b16 %v1544, %v1540
  %v1633 = vpack.c.b16 %v1545, %v1541
  %v1634 = vpack.c.b16 %v1550, %v1546
  %v1635 = vpack.c.b16 %v1551, %v1547
  %v1636 = vpack.c.b16 %v1552, %v1548
  %v1637 = vpack.c.b16 %v1553, %v1549
  %v1638 = vpack.c.b16 %v1558, %v1554
  %v1639 = vpack.c.b16 %v1559, %v1555
  %v1640 = vpack.c.b16 %v1560, %v1556
  %v1641 = vpack.c.b16 %v1561, %v1557
  %v1723 = vsel %vm1154, %v590, 0
  %1725 = vmatprep.subr.bf16.mxu0 %v1591
  %1726 = vmatpush1.bf16.msra.mxu0 %v1590
  %1727 = vmatprep.subr.bf16.mxu0 %v1587
  %1728 = vmatpush1.bf16.msra.mxu0 %v1586
  %1729 = vmatprep.subr.bf16.mxu0 %v1583
  %1730 = vmatpush1.bf16.msra.mxu0 %v1582
  %1731 = vmatprep.subr.bf16.mxu0 %v1579
  %1732 = vmatpush1.bf16.msra.mxu0 %v1578
  %1733 = vmatprep.subr.bf16.mxu0 %v1575
  %1734 = vmatpush1.bf16.msra.mxu0 %v1574
  %1735 = vmatprep.subr.bf16.mxu0 %v1571
  %1736 = vmatpush1.bf16.msra.mxu0 %v1570
  %1737 = vmatprep.subr.bf16.mxu0 %v1567
  %1738 = vmatpush1.bf16.msra.mxu0 %v1566
  %1739 = vmatprep.subr.bf16.mxu0 %v1563
  %1740 = vmatpush1.bf16.msra.mxu0 %v1562
  %1741 = vmatprep.subr.bf16.mxu0 %v1623
  %1742 = vmatpush2.bf16.msra.mxu0 %v1622
  %1743 = vmatprep.subr.bf16.mxu0 %v1619
  %1744 = vmatpush2.bf16.msra.mxu0 %v1618
  %1745 = vmatprep.subr.bf16.mxu0 %v1615
  %1746 = vmatpush2.bf16.msra.mxu0 %v1614
  %1747 = vmatprep.subr.bf16.mxu0 %v1611
  %1748 = vmatpush2.bf16.msra.mxu0 %v1610
  %1749 = vmatprep.subr.bf16.mxu0 %v1607
  %1750 = vmatpush2.bf16.msra.mxu0 %v1606
  %1751 = vmatprep.subr.bf16.mxu0 %v1603
  %1752 = vmatpush2.bf16.msra.mxu0 %v1602
  %1753 = vmatprep.subr.bf16.mxu0 %v1599
  %1754 = vmatpush2.bf16.msra.mxu0 %v1598
  %1755 = vmatprep.subr.bf16.mxu0 %v1595
  %1756 = vmatpush2.bf16.msra.mxu0 %v1594
  %1757 = vmatprep.mubr.bf16.mxu0 %v589
  %1758 = vmatmul.mubr.bf16.gmra.mxu0 %v588
  %v1759 = vpop.f32.mrf.mxu0
  %v1760 = vadd.f32 %v1234, %v1759
  %v1761 = vpop.f32.mrf.mxu0
  %v1762 = vadd.f32 %v1236, %v1761
  %v1763 = vpop.f32.mrf.mxu0
  %v1764 = vpop.f32.mrf.mxu0
  %1765 = vdwg.mxu0
  %1766 = vmatprep.subr.bf16.mxu0 0
  %1767 = vmatpush1.bf16.msra.mxu0 0
  %1768 = vmatprep.subr.bf16.mxu0 0
  %1769 = vmatpush1.bf16.msra.mxu0 0
  %1770 = vmatprep.subr.bf16.mxu0 0
  %1771 = vmatpush1.bf16.msra.mxu0 0
  %1772 = vmatprep.subr.bf16.mxu0 0
  %1773 = vmatpush1.bf16.msra.mxu0 0
  %1774 = vmatprep.subr.bf16.mxu0 %v1639
  %1775 = vmatpush1.bf16.msra.mxu0 %v1638
  %1776 = vmatprep.subr.bf16.mxu0 %v1635
  %1777 = vmatpush1.bf16.msra.mxu0 %v1634
  %1778 = vmatprep.subr.bf16.mxu0 %v1631
  %1779 = vmatpush1.bf16.msra.mxu0 %v1630
  %1780 = vmatprep.subr.bf16.mxu0 %v1627
  %1781 = vmatpush1.bf16.msra.mxu0 %v1626
  %1782 = vmatprep.subr.bf16.mxu0 0
  %1783 = vmatpush2.bf16.msra.mxu0 0
  %1784 = vmatprep.subr.bf16.mxu0 0
  %1785 = vmatpush2.bf16.msra.mxu0 0
  %1786 = vmatprep.subr.bf16.mxu0 0
  %1787 = vmatpush2.bf16.msra.mxu0 0
  %1788 = vmatprep.subr.bf16.mxu0 0
  %1789 = vmatpush2.bf16.msra.mxu0 0
  %1790 = vmatprep.subr.bf16.mxu0 0
  %1791 = vmatpush2.bf16.msra.mxu0 0
  %1792 = vmatprep.subr.bf16.mxu0 0
  %1793 = vmatpush2.bf16.msra.mxu0 0
  %1794 = vmatprep.subr.bf16.mxu0 0
  %1795 = vmatpush2.bf16.msra.mxu0 0
  %1796 = vmatprep.subr.bf16.mxu0 0
  %1797 = vmatpush2.bf16.msra.mxu0 0
  %1798 = vmatprep.mubr.bf16.mxu0 0
  %1799 = vmatmul.mubr.bf16.gmra.mxu0 %v1723
  %v1800 = vpop.f32.mrf.mxu0
  %v1801 = vadd.f32 %v1760, %v1800
  %v1802 = vpop.f32.mrf.mxu0
  %v1803 = vadd.f32 %v1762, %v1802
  %v1804 = vpop.f32.mrf.mxu0
  %v1805 = vpop.f32.mrf.mxu0
  %1806 = vdwg.mxu0
  %1807 = vmatprep.subr.bf16.mxu0 %v1593
  %1808 = vmatpush1.bf16.msra.mxu0 %v1592
  %1809 = vmatprep.subr.bf16.mxu0 %v1589
  %1810 = vmatpush1.bf16.msra.mxu0 %v1588
  %1811 = vmatprep.subr.bf16.mxu0 %v1585
  %1812 = vmatpush1.bf16.msra.mxu0 %v1584
  %1813 = vmatprep.subr.bf16.mxu0 %v1581
  %1814 = vmatpush1.bf16.msra.mxu0 %v1580
  %1815 = vmatprep.subr.bf16.mxu0 %v1577
  %1816 = vmatpush1.bf16.msra.mxu0 %v1576
  %1817 = vmatprep.subr.bf16.mxu0 %v1573
  %1818 = vmatpush1.bf16.msra.mxu0 %v1572
  %1819 = vmatprep.subr.bf16.mxu0 %v1569
  %1820 = vmatpush1.bf16.msra.mxu0 %v1568
  %1821 = vmatprep.subr.bf16.mxu0 %v1565
  %1822 = vmatpush1.bf16.msra.mxu0 %v1564
  %1823 = vmatprep.subr.bf16.mxu0 %v1625
  %1824 = vmatpush2.bf16.msra.mxu0 %v1624
  %1825 = vmatprep.subr.bf16.mxu0 %v1621
  %1826 = vmatpush2.bf16.msra.mxu0 %v1620
  %1827 = vmatprep.subr.bf16.mxu0 %v1617
  %1828 = vmatpush2.bf16.msra.mxu0 %v1616
  %1829 = vmatprep.subr.bf16.mxu0 %v1613
  %1830 = vmatpush2.bf16.msra.mxu0 %v1612
  %1831 = vmatprep.subr.bf16.mxu0 %v1609
  %1832 = vmatpush2.bf16.msra.mxu0 %v1608
  %1833 = vmatprep.subr.bf16.mxu0 %v1605
  %1834 = vmatpush2.bf16.msra.mxu0 %v1604
  %1835 = vmatprep.subr.bf16.mxu0 %v1601
  %1836 = vmatpush2.bf16.msra.mxu0 %v1600
  %1837 = vmatprep.subr.bf16.mxu0 %v1597
  %1838 = vmatpush2.bf16.msra.mxu0 %v1596
  %1839 = vmatprep.mubr.bf16.mxu0 %v589
  %1840 = vmatmul.mubr.bf16.gmra.mxu0 %v588
  %v1841 = vpop.f32.mrf.mxu0
  %v1842 = vadd.f32 %v1316, %v1841
  %v1843 = vpop.f32.mrf.mxu0
  %v1844 = vadd.f32 %v1318, %v1843
  %v1845 = vpop.f32.mrf.mxu0
  %v1846 = vpop.f32.mrf.mxu0
  %1847 = vdwg.mxu0
  %1848 = vmatprep.subr.bf16.mxu0 0
  %1849 = vmatpush1.bf16.msra.mxu0 0
  %1850 = vmatprep.subr.bf16.mxu0 0
  %1851 = vmatpush1.bf16.msra.mxu0 0
  %1852 = vmatprep.subr.bf16.mxu0 0
  %1853 = vmatpush1.bf16.msra.mxu0 0
  %1854 = vmatprep.subr.bf16.mxu0 0
  %1855 = vmatpush1.bf16.msra.mxu0 0
  %1856 = vmatprep.subr.bf16.mxu0 %v1641
  %1857 = vmatpush1.bf16.msra.mxu0 %v1640
  %1858 = vmatprep.subr.bf16.mxu0 %v1637
  %1859 = vmatpush1.bf16.msra.mxu0 %v1636
  %1860 = vmatprep.subr.bf16.mxu0 %v1633
  %1861 = vmatpush1.bf16.msra.mxu0 %v1632
  %1862 = vmatprep.subr.bf16.mxu0 %v1629
  %1863 = vmatpush1.bf16.msra.mxu0 %v1628
  %1864 = vmatprep.subr.bf16.mxu0 0
  %1865 = vmatpush2.bf16.msra.mxu0 0
  %1866 = vmatprep.subr.bf16.mxu0 0
  %1867 = vmatpush2.bf16.msra.mxu0 0
  %1868 = vmatprep.subr.bf16.mxu0 0
  %1869 = vmatpush2.bf16.msra.mxu0 0
  %1870 = vmatprep.subr.bf16.mxu0 0
  %1871 = vmatpush2.bf16.msra.mxu0 0
  %1872 = vmatprep.subr.bf16.mxu0 0
  %1873 = vmatpush2.bf16.msra.mxu0 0
  %1874 = vmatprep.subr.bf16.mxu0 0
  %1875 = vmatpush2.bf16.msra.mxu0 0
  %1876 = vmatprep.subr.bf16.mxu0 0
  %1877 = vmatpush2.bf16.msra.mxu0 0
  %1878 = vmatprep.subr.bf16.mxu0 0
  %1879 = vmatpush2.bf16.msra.mxu0 0
  %1880 = vmatprep.mubr.bf16.mxu0 0
  %1881 = vmatmul.mubr.bf16.gmra.mxu0 %v1723
  %v1882 = vpop.f32.mrf.mxu0
  %v1883 = vadd.f32 %v1842, %v1882
  %v1884 = vpop.f32.mrf.mxu0
  %v1885 = vadd.f32 %v1844, %v1884
  %v1886 = vpop.f32.mrf.mxu0
  %v1887 = vpop.f32.mrf.mxu0
  %1888 = vdwg.mxu0
  %s1889 = scalar_lea.vmem %s6, 1
  %v1890 = vld [vmem:[%s1889] ss:$8 sm:$0x7]
  %v1892 = vlaneseq
  %v1893 = vshrl.u32 %v1892, 7
  %v1894 = vsub.s32 0, %v1893
  %v1895 = vrot.slane %v1890, %v1894
  %v1896 = vlaneseq
  %v1897 = vshrl.u32 %v1896, 7
  %v1898 = vsub.s32 1, %v1897
  %v1899 = vrot.slane %v1890, %v1898
  %v1900 = vlaneseq
  %v1901 = vshrl.u32 %v1900, 7
  %v1902 = vsub.s32 2, %v1901
  %v1903 = vrot.slane %v1890, %v1902
  %v1907 = vadd.f32 %v1803, %v1895
  %v1908 = vadd.f32 %v1883, %v1899
  %v1909 = vadd.f32 %v1885, %v1903
  %vm1910 = vcmp.gt.f32.partialorder %v1907, 0.0
  %vm1911 = vcmp.gt.f32.partialorder %v1908, 0.0
  %vm1912 = vcmp.gt.f32.partialorder %v1909, 0.0
  %v1913 = vmul.f32 %v1907, 0.01
  %v1914 = vmul.f32 %v1908, 0.01
  %v1915 = vmul.f32 %v1909, 0.01
  %v1916 = vsel %vm1910, %v1907, %v1913
  %v1917 = vsel %vm1911, %v1908, %v1914
  %v1918 = vsel %vm1912, %v1909, %v1915
  %v1919 = vpack.c.bf16 %v1916, %v1916
  %v1920 = vpack.c.bf16 %v1917, %v1917
  %v1921 = vpack.c.bf16 %v1918, %v1918
  %v1922 = vld [vmem:[%s6 + $0x3] ss:$0 sm:$0xff]
  %v1923 = vld [vmem:[%s5] sm:$0xf]
  %v1924 = vld [vmem:[%s5 + $0x4] sm:$0xf]
  %v1925 = vld [vmem:[%s5 + $0x8] sm:$0xf]
  %v1926 = vld [vmem:[%s5 + $0xc] sm:$0xf]
  %v1927 = vld [vmem:[%s5 + $0x10] sm:$0xf]
  %v1928 = vld [vmem:[%s5 + $0x14] sm:$0xf]
  %v1929 = vld [vmem:[%s5 + $0x18] sm:$0xf]
  %v1930 = vld [vmem:[%s5 + $0x1c] sm:$0xf]
  %v1931 = vld [vmem:[%s5 + $0x20] sm:$0xf]
  %v1932 = vld [vmem:[%s5 + $0x24] sm:$0xf]
  %v1933 = vld [vmem:[%s5 + $0x28] sm:$0xf]
  %v1934 = vld [vmem:[%s5 + $0x2c] sm:$0xf]
  %v1935 = vld [vmem:[%s5 + $0x30] sm:$0xf]
  %v1936 = vld [vmem:[%s5 + $0x34] sm:$0xf]
  %v1937 = vld [vmem:[%s5 + $0x38] sm:$0xf]
  %v1938 = vld [vmem:[%s5 + $0x3c] sm:$0xf]
  %v1939 = vld [vmem:[%s5 + $0x40] sm:$0xf]
  %v1940 = vld [vmem:[%s5 + $0x44] sm:$0xf]
  %v1941 = vld [vmem:[%s5 + $0x48] sm:$0xf]
  %v1942 = vld [vmem:[%s5 + $0x4c] sm:$0xf]
  %v1943 = vld [vmem:[%s5 + $0x50] sm:$0xf]
  %v1944 = vld [vmem:[%s5 + $0x54] sm:$0xf]
  %v1945 = vld [vmem:[%s5 + $0x58] sm:$0xf]
  %v1946 = vld [vmem:[%s5 + $0x5c] sm:$0xf]
  %v1947 = vld [vmem:[%s5 + $0x60] sm:$0xf]
  %v1948 = vld [vmem:[%s5 + $0x64] sm:$0xf]
  %v1949 = vld [vmem:[%s5 + $0x68] sm:$0xf]
  %v1950 = vld [vmem:[%s5 + $0x6c] sm:$0xf]
  %v1951 = vld [vmem:[%s5 + $0x70] sm:$0xf]
  %v1952 = vld [vmem:[%s5 + $0x74] sm:$0xf]
  %v1953 = vld [vmem:[%s5 + $0x78] sm:$0xf]
  %v1954 = vld [vmem:[%s5 + $0x7c] sm:$0xf]
  %v1955 = vld [vmem:[%s5 + $0x80] sm:$0xf]
  %v1956 = vld [vmem:[%s5 + $0x84] sm:$0xf]
  %v1957 = vld [vmem:[%s5 + $0x88] sm:$0xf]
  %v1958 = vld [vmem:[%s5 + $0x8c] sm:$0xf]
  %v1959 = vld [vmem:[%s5 + $0x90] sm:$0xf]
  %v1960 = vld [vmem:[%s5 + $0x94] sm:$0xf]
  %v1961 = vld [vmem:[%s5 + $0x98] sm:$0xf]
  %v1962 = vld [vmem:[%s5 + $0x9c] sm:$0xf]
  %v2003 = vunpack.c.l.b16 %v1923
  %v2004 = vunpack.c.l.b16 %v1924
  %v2005 = vunpack.c.l.b16 %v1925
  %v2006 = vunpack.c.l.b16 %v1926
  %v2007 = vunpack.c.l.b16 %v1927
  %v2008 = vunpack.c.l.b16 %v1928
  %v2009 = vunpack.c.l.b16 %v1929
  %v2010 = vunpack.c.l.b16 %v1930
  %v2011 = vunpack.c.l.b16 %v1931
  %v2012 = vunpack.c.l.b16 %v1932
  %v2013 = vunpack.c.l.b16 %v1933
  %v2014 = vunpack.c.l.b16 %v1934
  %v2015 = vunpack.c.l.b16 %v1935
  %v2016 = vunpack.c.l.b16 %v1936
  %v2017 = vunpack.c.l.b16 %v1937
  %v2018 = vunpack.c.l.b16 %v1938
  %v2019 = vunpack.c.l.b16 %v1939
  %v2020 = vunpack.c.l.b16 %v1940
  %v2021 = vunpack.c.l.b16 %v1941
  %v2022 = vunpack.c.l.b16 %v1942
  %v2023 = vunpack.c.l.b16 %v1943
  %v2024 = vunpack.c.l.b16 %v1944
  %v2025 = vunpack.c.l.b16 %v1945
  %v2026 = vunpack.c.l.b16 %v1946
  %v2027 = vunpack.c.l.b16 %v1947
  %v2028 = vunpack.c.l.b16 %v1948
  %v2029 = vunpack.c.l.b16 %v1949
  %v2030 = vunpack.c.l.b16 %v1950
  %v2031 = vunpack.c.l.b16 %v1951
  %v2032 = vunpack.c.l.b16 %v1952
  %v2033 = vunpack.c.l.b16 %v1953
  %v2034 = vunpack.c.l.b16 %v1954
  %v2035 = vunpack.c.l.b16 %v1955
  %v2036 = vunpack.c.l.b16 %v1956
  %v2037 = vunpack.c.l.b16 %v1957
  %v2038 = vunpack.c.l.b16 %v1958
  %v2039 = vunpack.c.l.b16 %v1959
  %v2040 = vunpack.c.l.b16 %v1960
  %v2041 = vunpack.c.l.b16 %v1961
  %v2042 = vunpack.c.l.b16 %v1962
  %v2043 = vpack.c.b16 %v2004, %v2003
  %v2044 = vpack.c.b16 %v2006, %v2005
  %v2045 = vpack.c.b16 %v2008, %v2007
  %v2046 = vpack.c.b16 %v2010, %v2009
  %v2047 = vpack.c.b16 %v2012, %v2011
  %v2048 = vpack.c.b16 %v2014, %v2013
  %v2049 = vpack.c.b16 %v2016, %v2015
  %v2050 = vpack.c.b16 %v2018, %v2017
  %v2051 = vpack.c.b16 %v2020, %v2019
  %v2052 = vpack.c.b16 %v2022, %v2021
  %v2053 = vpack.c.b16 %v2024, %v2023
  %v2054 = vpack.c.b16 %v2026, %v2025
  %v2055 = vpack.c.b16 %v2028, %v2027
  %v2056 = vpack.c.b16 %v2030, %v2029
  %v2057 = vpack.c.b16 %v2032, %v2031
  %v2058 = vpack.c.b16 %v2034, %v2033
  %v2059 = vpack.c.b16 %v2036, %v2035
  %v2060 = vpack.c.b16 %v2038, %v2037
  %v2061 = vpack.c.b16 %v2040, %v2039
  %v2062 = vpack.c.b16 %v2042, %v2041
  %v2084 = vsel %vm1154, %v1921, 0
  %2086 = vmatprep.subr.bf16.mxu0 0
  %2087 = vmatpush1.bf16.msra.mxu0 %v2050
  %2088 = vmatprep.subr.bf16.mxu0 0
  %2089 = vmatpush1.bf16.msra.mxu0 %v2049
  %2090 = vmatprep.subr.bf16.mxu0 0
  %2091 = vmatpush1.bf16.msra.mxu0 %v2048
  %2092 = vmatprep.subr.bf16.mxu0 0
  %2093 = vmatpush1.bf16.msra.mxu0 %v2047
  %2094 = vmatprep.subr.bf16.mxu0 0
  %2095 = vmatpush1.bf16.msra.mxu0 %v2046
  %2096 = vmatprep.subr.bf16.mxu0 0
  %2097 = vmatpush1.bf16.msra.mxu0 %v2045
  %2098 = vmatprep.subr.bf16.mxu0 0
  %2099 = vmatpush1.bf16.msra.mxu0 %v2044
  %2100 = vmatprep.subr.bf16.mxu0 0
  %2101 = vmatpush1.bf16.msra.mxu0 %v2043
  %2102 = vmatprep.subr.bf16.mxu0 0
  %2103 = vmatpush2.bf16.msra.mxu0 %v2058
  %2104 = vmatprep.subr.bf16.mxu0 0
  %2105 = vmatpush2.bf16.msra.mxu0 %v2057
  %2106 = vmatprep.subr.bf16.mxu0 0
  %2107 = vmatpush2.bf16.msra.mxu0 %v2056
  %2108 = vmatprep.subr.bf16.mxu0 0
  %2109 = vmatpush2.bf16.msra.mxu0 %v2055
  %2110 = vmatprep.subr.bf16.mxu0 0
  %2111 = vmatpush2.bf16.msra.mxu0 %v2054
  %2112 = vmatprep.subr.bf16.mxu0 0
  %2113 = vmatpush2.bf16.msra.mxu0 %v2053
  %2114 = vmatprep.subr.bf16.mxu0 0
  %2115 = vmatpush2.bf16.msra.mxu0 %v2052
  %2116 = vmatprep.subr.bf16.mxu0 0
  %2117 = vmatpush2.bf16.msra.mxu0 %v2051
  %2118 = vmatprep.mubr.bf16.mxu0 %v1920
  %2119 = vmatmul.mubr.bf16.gmra.mxu0 %v1919
  %v2120 = vpop.f32.mrf.mxu0
  %v2121 = vadd.f32 %v1922, %v2120
  %v2122 = vpop.f32.mrf.mxu0
  %v2123 = vpop.f32.mrf.mxu0
  %v2124 = vpop.f32.mrf.mxu0
  %2125 = vdwg.mxu0
  %2126 = vmatprep.subr.bf16.mxu0 0
  %2127 = vmatpush1.bf16.msra.mxu0 0
  %2128 = vmatprep.subr.bf16.mxu0 0
  %2129 = vmatpush1.bf16.msra.mxu0 0
  %2130 = vmatprep.subr.bf16.mxu0 0
  %2131 = vmatpush1.bf16.msra.mxu0 0
  %2132 = vmatprep.subr.bf16.mxu0 0
  %2133 = vmatpush1.bf16.msra.mxu0 0
  %2134 = vmatprep.subr.bf16.mxu0 0
  %2135 = vmatpush1.bf16.msra.mxu0 %v2062
  %2136 = vmatprep.subr.bf16.mxu0 0
  %2137 = vmatpush1.bf16.msra.mxu0 %v2061
  %2138 = vmatprep.subr.bf16.mxu0 0
  %2139 = vmatpush1.bf16.msra.mxu0 %v2060
  %2140 = vmatprep.subr.bf16.mxu0 0
  %2141 = vmatpush1.bf16.msra.mxu0 %v2059
  %2142 = vmatprep.subr.bf16.mxu0 0
  %2143 = vmatpush2.bf16.msra.mxu0 0
  %2144 = vmatprep.subr.bf16.mxu0 0
  %2145 = vmatpush2.bf16.msra.mxu0 0
  %2146 = vmatprep.subr.bf16.mxu0 0
  %2147 = vmatpush2.bf16.msra.mxu0 0
  %2148 = vmatprep.subr.bf16.mxu0 0
  %2149 = vmatpush2.bf16.msra.mxu0 0
  %2150 = vmatprep.subr.bf16.mxu0 0
  %2151 = vmatpush2.bf16.msra.mxu0 0
  %2152 = vmatprep.subr.bf16.mxu0 0
  %2153 = vmatpush2.bf16.msra.mxu0 0
  %2154 = vmatprep.subr.bf16.mxu0 0
  %2155 = vmatpush2.bf16.msra.mxu0 0
  %2156 = vmatprep.subr.bf16.mxu0 0
  %2157 = vmatpush2.bf16.msra.mxu0 0
  %2158 = vmatprep.mubr.bf16.mxu0 0
  %2159 = vmatmul.mubr.bf16.gmra.mxu0 %v2084
  %v2160 = vpop.f32.mrf.mxu0
  %v2161 = vadd.f32 %v2121, %v2160
  %v2162 = vpop.f32.mrf.mxu0
  %v2163 = vpop.f32.mrf.mxu0
  %v2164 = vpop.f32.mrf.mxu0
  %2165 = vdwg.mxu0
  %v2166 = vld [vmem:[%s6 + $0x2] ss:$0 sm:$0xff]
  %v2167 = vpack.c.bf16 %v2161, %v2161
  %v2168 = vld [vmem:[%s4] sm:$0xf]
  %v2169 = vld [vmem:[%s4 + $0x4] sm:$0xf]
  %v2170 = vld [vmem:[%s4 + $0x8] sm:$0xf]
  %v2171 = vld [vmem:[%s4 + $0xc] sm:$0xf]
  %v2172 = vld [vmem:[%s4 + $0x10] sm:$0xf]
  %v2173 = vld [vmem:[%s4 + $0x14] sm:$0xf]
  %v2174 = vld [vmem:[%s4 + $0x18] sm:$0xf]
  %v2175 = vld [vmem:[%s4 + $0x1c] sm:$0xf]
  %v2176 = vld [vmem:[%s4 + $0x20] sm:$0xf]
  %v2177 = vld [vmem:[%s4 + $0x24] sm:$0xf]
  %v2178 = vld [vmem:[%s4 + $0x28] sm:$0xf]
  %v2179 = vld [vmem:[%s4 + $0x2c] sm:$0xf]
  %v2180 = vld [vmem:[%s4 + $0x30] sm:$0xf]
  %v2181 = vld [vmem:[%s4 + $0x34] sm:$0xf]
  %v2182 = vld [vmem:[%s4 + $0x38] sm:$0xf]
  %v2183 = vld [vmem:[%s4 + $0x3c] sm:$0xf]
  %v2200 = vunpack.c.l.b16 %v2168
  %v2201 = vunpack.c.l.b16 %v2169
  %v2202 = vunpack.c.l.b16 %v2170
  %v2203 = vunpack.c.l.b16 %v2171
  %v2204 = vunpack.c.l.b16 %v2172
  %v2205 = vunpack.c.l.b16 %v2173
  %v2206 = vunpack.c.l.b16 %v2174
  %v2207 = vunpack.c.l.b16 %v2175
  %v2208 = vunpack.c.l.b16 %v2176
  %v2209 = vunpack.c.l.b16 %v2177
  %v2210 = vunpack.c.l.b16 %v2178
  %v2211 = vunpack.c.l.b16 %v2179
  %v2212 = vunpack.c.l.b16 %v2180
  %v2213 = vunpack.c.l.b16 %v2181
  %v2214 = vunpack.c.l.b16 %v2182
  %v2215 = vunpack.c.l.b16 %v2183
  %v2216 = vpack.c.b16 %v2201, %v2200
  %v2217 = vpack.c.b16 %v2203, %v2202
  %v2218 = vpack.c.b16 %v2205, %v2204
  %v2219 = vpack.c.b16 %v2207, %v2206
  %v2220 = vpack.c.b16 %v2209, %v2208
  %v2221 = vpack.c.b16 %v2211, %v2210
  %v2222 = vpack.c.b16 %v2213, %v2212
  %v2223 = vpack.c.b16 %v2215, %v2214
  %2232 = vmatprep.subr.bf16.mxu0 0
  %2233 = vmatpush1.bf16.msra.mxu0 %v2223
  %2234 = vmatprep.subr.bf16.mxu0 0
  %2235 = vmatpush1.bf16.msra.mxu0 %v2222
  %2236 = vmatprep.subr.bf16.mxu0 0
  %2237 = vmatpush1.bf16.msra.mxu0 %v2221
  %2238 = vmatprep.subr.bf16.mxu0 0
  %2239 = vmatpush1.bf16.msra.mxu0 %v2220
  %2240 = vmatprep.subr.bf16.mxu0 0
  %2241 = vmatpush1.bf16.msra.mxu0 %v2219
  %2242 = vmatprep.subr.bf16.mxu0 0
  %2243 = vmatpush1.bf16.msra.mxu0 %v2218
  %2244 = vmatprep.subr.bf16.mxu0 0
  %2245 = vmatpush1.bf16.msra.mxu0 %v2217
  %2246 = vmatprep.subr.bf16.mxu0 0
  %2247 = vmatpush1.bf16.msra.mxu0 %v2216
  %2248 = vmatprep.subr.bf16.mxu0 0
  %2249 = vmatpush2.bf16.msra.mxu0 0
  %2250 = vmatprep.subr.bf16.mxu0 0
  %2251 = vmatpush2.bf16.msra.mxu0 0
  %2252 = vmatprep.subr.bf16.mxu0 0
  %2253 = vmatpush2.bf16.msra.mxu0 0
  %2254 = vmatprep.subr.bf16.mxu0 0
  %2255 = vmatpush2.bf16.msra.mxu0 0
  %2256 = vmatprep.subr.bf16.mxu0 0
  %2257 = vmatpush2.bf16.msra.mxu0 0
  %2258 = vmatprep.subr.bf16.mxu0 0
  %2259 = vmatpush2.bf16.msra.mxu0 0
  %2260 = vmatprep.subr.bf16.mxu0 0
  %2261 = vmatpush2.bf16.msra.mxu0 0
  %2262 = vmatprep.subr.bf16.mxu0 0
  %2263 = vmatpush2.bf16.msra.mxu0 0
  %2264 = vmatprep.mubr.bf16.mxu0 0
  %2265 = vmatmul.mubr.bf16.gmra.mxu0 %v2167
  %v2266 = vpop.f32.mrf.mxu0
  %v2267 = vadd.f32 0.0, %v2266
  %v2268 = vpop.f32.mrf.mxu0
  %v2269 = vpop.f32.mrf.mxu0
  %v2270 = vpop.f32.mrf.mxu0
  %2271 = vdwg.mxu0
  %v2272 = vadd.f32 %v1801, %v2267
  %v2273 = vadd.f32 %v2272, %v2166
  %v2274 = vmax.f32 %v2273, 0.0
  %v2275 = vpack.c.bf16 %v2274, %v2274
  %v2276 = vld [vmem:[%s5 + $0xa0] sm:$0xf]
  %v2277 = vld [vmem:[%s5 + $0xa4] sm:$0xf]
  %v2278 = vld [vmem:[%s5 + $0xa8] sm:$0xf]
  %v2279 = vld [vmem:[%s5 + $0xac] sm:$0xf]
  %v2280 = vld [vmem:[%s5 + $0xb0] sm:$0xf]
  %v2281 = vld [vmem:[%s5 + $0xb4] sm:$0xf]
  %v2282 = vld [vmem:[%s5 + $0xb8] sm:$0xf]
  %v2283 = vld [vmem:[%s5 + $0xbc] sm:$0xf]
  %v2284 = vld [vmem:[%s5 + $0xc0] sm:$0xf]
  %v2285 = vld [vmem:[%s5 + $0xc4] sm:$0xf]
  %v2286 = vld [vmem:[%s5 + $0xc8] sm:$0xf]
  %v2287 = vld [vmem:[%s5 + $0xcc] sm:$0xf]
  %v2288 = vld [vmem:[%s5 + $0xd0] sm:$0xf]
  %v2289 = vld [vmem:[%s5 + $0xd4] sm:$0xf]
  %v2290 = vld [vmem:[%s5 + $0xd8] sm:$0xf]
  %v2291 = vld [vmem:[%s5 + $0xdc] sm:$0xf]
  %v2308 = vunpack.c.l.b16 %v2276
  %v2309 = vunpack.c.l.b16 %v2277
  %v2310 = vunpack.c.l.b16 %v2278
  %v2311 = vunpack.c.l.b16 %v2279
  %v2312 = vunpack.c.l.b16 %v2280
  %v2313 = vunpack.c.l.b16 %v2281
  %v2314 = vunpack.c.l.b16 %v2282
  %v2315 = vunpack.c.l.b16 %v2283
  %v2316 = vunpack.c.l.b16 %v2284
  %v2317 = vunpack.c.l.b16 %v2285
  %v2318 = vunpack.c.l.b16 %v2286
  %v2319 = vunpack.c.l.b16 %v2287
  %v2320 = vunpack.c.l.b16 %v2288
  %v2321 = vunpack.c.l.b16 %v2289
  %v2322 = vunpack.c.l.b16 %v2290
  %v2323 = vunpack.c.l.b16 %v2291
  %v2324 = vpack.c.b16 %v2309, %v2308
  %v2325 = vpack.c.b16 %v2311, %v2310
  %v2326 = vpack.c.b16 %v2313, %v2312
  %v2327 = vpack.c.b16 %v2315, %v2314
  %v2328 = vpack.c.b16 %v2317, %v2316
  %v2329 = vpack.c.b16 %v2319, %v2318
  %v2330 = vpack.c.b16 %v2321, %v2320
  %v2331 = vpack.c.b16 %v2323, %v2322
  %2340 = vmatprep.subr.bf16.mxu0 0
  %2341 = vmatpush1.bf16.msra.mxu0 %v2331
  %2342 = vmatprep.subr.bf16.mxu0 0
  %2343 = vmatpush1.bf16.msra.mxu0 %v2330
  %2344 = vmatprep.subr.bf16.mxu0 0
  %2345 = vmatpush1.bf16.msra.mxu0 %v2329
  %2346 = vmatprep.subr.bf16.mxu0 0
  %2347 = vmatpush1.bf16.msra.mxu0 %v2328
  %2348 = vmatprep.subr.bf16.mxu0 0
  %2349 = vmatpush1.bf16.msra.mxu0 %v2327
  %2350 = vmatprep.subr.bf16.mxu0 0
  %2351 = vmatpush1.bf16.msra.mxu0 %v2326
  %2352 = vmatprep.subr.bf16.mxu0 0
  %2353 = vmatpush1.bf16.msra.mxu0 %v2325
  %2354 = vmatprep.subr.bf16.mxu0 0
  %2355 = vmatpush1.bf16.msra.mxu0 %v2324
  %2356 = vmatprep.subr.bf16.mxu0 0
  %2357 = vmatpush2.bf16.msra.mxu0 0
  %2358 = vmatprep.subr.bf16.mxu0 0
  %2359 = vmatpush2.bf16.msra.mxu0 0
  %2360 = vmatprep.subr.bf16.mxu0 0
  %2361 = vmatpush2.bf16.msra.mxu0 0
  %2362 = vmatprep.subr.bf16.mxu0 0
  %2363 = vmatpush2.bf16.msra.mxu0 0
  %2364 = vmatprep.subr.bf16.mxu0 0
  %2365 = vmatpush2.bf16.msra.mxu0 0
  %2366 = vmatprep.subr.bf16.mxu0 0
  %2367 = vmatpush2.bf16.msra.mxu0 0
  %2368 = vmatprep.subr.bf16.mxu0 0
  %2369 = vmatpush2.bf16.msra.mxu0 0
  %2370 = vmatprep.subr.bf16.mxu0 0
  %2371 = vmatpush2.bf16.msra.mxu0 0
  %2372 = vmatprep.mubr.bf16.mxu0 0
  %2373 = vmatmul.mubr.bf16.gmra.mxu0 %v2275
  %v2374 = vpop.f32.mrf.mxu0
  %v2375 = vadd.f32 0.0, %v2374
  %v2376 = vpop.f32.mrf.mxu0
  %v2377 = vpop.f32.mrf.mxu0
  %v2378 = vpop.f32.mrf.mxu0
  %2379 = vdwg.mxu0
  %v2380 = vadd.f32 %v2161, %v2375
  %2381 = vst [vmem:[%s7] sm:$0xff] %v2380
  // Predicated region
  $region30: #{fft2c_forward.1} parent=0 // pred_check
    _
  $region31: #{fft2c_forward.1} parent=0 // pred_check_branch
    %2383 = sbr.rel (0) target = $region33
  $region32: #{fft2c_forward.1} parent=0 // pred_region
    _
  $region33: #{fft2c_forward.1} parent=0 // pred_fallthru
    _
  // Predicated region
  $region34: #{fft2c_forward.1} parent=0 // pred_check
    _
  $region35: #{fft2c_forward.1} parent=0 // pred_check_branch
    %2385 = sbr.rel (0) target = $region37
  $region36: #{fft2c_forward.1} parent=0 // pred_region
    _
  $region37: #{fft2c_forward.1} parent=0 // pred_fallthru
    _

</llo_original>
